<compile_context>
chip_gen: v7x
topology: tpu7x:2x2x1
jax: 0.10.0
libtpu: 0.0.40
codegen_flags: <defaults>
</compile_context>

<pallas_src>
import functools
import math

import jax
import jax.numpy as jnp
from jax import lax
from jax.experimental import pallas as pl
from jax.experimental.pallas import tpu as pltpu


def _round_up(x, m):
    return (x + m - 1) // m * m


# ----------------------------------------------------------------------------
# Tiled matmul kernel: o = relu?( x @ w + b [+ res] )
# ----------------------------------------------------------------------------
def _matmul_kernel(x_ref, w_ref, b_ref, *rest, relu, has_res):
    if has_res:
        r_ref, o_ref, acc_ref = rest
    else:
        o_ref, acc_ref = rest

    k = pl.program_id(2)

    @pl.when(k == 0)
    def _():
        acc_ref[...] = jnp.zeros_like(acc_ref)

    acc_ref[...] += jnp.dot(x_ref[...], w_ref[...],
                            preferred_element_type=jnp.float32)

    @pl.when(k == pl.num_programs(2) - 1)
    def _():
        out = acc_ref[...] + b_ref[...]          # b: (1, tn) broadcasts over rows
        if has_res:
            out = out + r_ref[...]
        if relu:
            out = jnp.maximum(out, 0.0)
        o_ref[...] = out.astype(o_ref.dtype)


def matmul_bias(x, w, b, *, res=None, relu=False, tm=256, tn=256, tk=512):
    """x:[M,K] @ w:[K,N] + b:[N] (+ res:[M,N]) -> f32 [M,N].

    Operands are cast to bf16 (f32 accumulation); M/N/K are zero-padded so every
    block is (8,128)-aligned and the output store is lane-dense.
    """
    M, K = x.shape
    K2, N = w.shape
    assert K == K2

    tm = min(tm, _round_up(M, 8))
    tn = min(tn, _round_up(N, 128))
    tk = min(tk, _round_up(K, 128))
    Mp, Np, Kp = _round_up(M, tm), _round_up(N, tn), _round_up(K, tk)

    xb = jnp.pad(x.astype(jnp.bfloat16), ((0, Mp - M), (0, Kp - K)))
    wb = jnp.pad(w.astype(jnp.bfloat16), ((0, Kp - K), (0, Np - N)))
    bb = jnp.pad(b.reshape(1, -1).astype(jnp.float32), ((0, 0), (0, Np - N)))

    inputs = [xb, wb, bb]
    in_specs = [
        pl.BlockSpec((tm, tk), lambda i, j, k: (i, k)),
        pl.BlockSpec((tk, tn), lambda i, j, k: (k, j)),
        pl.BlockSpec((1, tn), lambda i, j, k: (0, j)),
    ]
    has_res = res is not None
    if has_res:
        rb = jnp.pad(res.astype(jnp.float32), ((0, Mp - M), (0, Np - N)))
        inputs.append(rb)
        in_specs.append(pl.BlockSpec((tm, tn), lambda i, j, k: (i, j)))

    out = pl.pallas_call(
        functools.partial(_matmul_kernel, relu=relu, has_res=has_res),
        out_shape=jax.ShapeDtypeStruct((Mp, Np), jnp.float32),
        grid_spec=pltpu.PrefetchScalarGridSpec(
            num_scalar_prefetch=0,
            grid=(Mp // tm, Np // tn, Kp // tk),
            in_specs=in_specs,
            out_specs=pl.BlockSpec((tm, tn), lambda i, j, k: (i, j)),
            scratch_shapes=[pltpu.VMEM((tm, tn), jnp.float32)],
        ),
        compiler_params=pltpu.CompilerParams(
            dimension_semantics=("parallel", "parallel", "arbitrary"),
            vmem_limit_bytes=32 * 1024 * 1024,
        ),
    )(*inputs)
    return out[:M, :N]


# ----------------------------------------------------------------------------
# Bidirectional LSTM layer kernel: grid=(2,) over direction, fori_loop over time.
# ----------------------------------------------------------------------------
def _bilstm_kernel(xp_ref, whh_ref, out_ref, *, T, B, H):
    """One direction per grid step (d=0 fwd, d=1 bwd).

    xp_ref : (T, B, 8H) f32  -- fused input projections [fwd | bwd], gate order i,f,o,g
    whh_ref: (1, H, 4H) bf16 -- this direction's recurrent weight (transposed, reordered)
    out_ref: (1, T, B, H) f32 -- this direction's hidden states, already time-aligned
    """
    d = pl.program_id(0)
    G = 4 * H
    whh = whh_ref[0]                               # (H, 4H) bf16, hoisted out of the loop

    def step(t, carry):
        h, c = carry
        t_eff = jnp.where(d == 0, t, T - 1 - t)    # backward direction via index math
        row = xp_ref[t_eff]                        # (B, 8H)
        gx = jnp.where(d == 0, row[:, :G], row[:, G:])
        gates = gx + jnp.dot(h.astype(jnp.bfloat16), whh,
                             preferred_element_type=jnp.float32)
        sig = jax.nn.sigmoid(gates[:, :3 * H])     # one EUP pass for i|f|o
        i_g = sig[:, :H]
        f_g = sig[:, H:2 * H]
        o_g = sig[:, 2 * H:3 * H]
        g_g = jnp.tanh(gates[:, 3 * H:])
        c_new = f_g * c + i_g * g_g
        h_new = o_g * jnp.tanh(c_new)
        out_ref[0, t_eff] = h_new.astype(out_ref.dtype)
        return h_new, c_new

    zeros = jnp.zeros((B, H), jnp.float32)
    lax.fori_loop(0, T, step, (zeros, zeros))


def _bilstm_call(xp, whh_stacked, *, T, B, H):
    return pl.pallas_call(
        functools.partial(_bilstm_kernel, T=T, B=B, H=H),
        out_shape=jax.ShapeDtypeStruct((2, T, B, H), jnp.float32),
        grid_spec=pltpu.PrefetchScalarGridSpec(
            num_scalar_prefetch=0,
            grid=(2,),
            in_specs=[
                pl.BlockSpec((T, B, 8 * H), lambda d: (0, 0, 0)),
                pl.BlockSpec((1, H, 4 * H), lambda d: (d, 0, 0)),
            ],
            out_specs=pl.BlockSpec((1, T, B, H), lambda d: (d, 0, 0, 0)),
        ),
        compiler_params=pltpu.CompilerParams(
            dimension_semantics=("parallel",),     # both directions independent -> 2 TCs on v7x
        ),
    )(xp, whh_stacked)


def _reorder_ifgo_to_ifog(a, axis=0):
    """PyTorch gate order (i,f,g,o) -> (i,f,o,g) so sigmoid covers a contiguous 3H block."""
    i, f, g, o = jnp.split(a, 4, axis=axis)
    return jnp.concatenate([i, f, o, g], axis=axis)


def _prep_direction(prm, ):
    wih_t = _reorder_ifgo_to_ifog(prm["Wih"], axis=0).T          # [Din, 4H]
    whh_t = _reorder_ifgo_to_ifog(prm["Whh"], axis=0).T          # [H, 4H]
    bias = _reorder_ifgo_to_ifog(prm["bih"] + prm["bhh"], axis=0)  # [4H]
    return wih_t, whh_t, bias


def bilstm(x, lstm_p, H):
    """x:[T,B,Din] -> [T,B,2H]; PyTorch bidirectional LSTM semantics."""
    T, B, Din = x.shape
    wih_f, whh_f, b_f = _prep_direction(lstm_p["fwd"])
    wih_b, whh_b, b_b = _prep_direction(lstm_p["bwd"])

    # Fused input projection for both directions: one [T*B, Din] x [Din, 8H] matmul.
    wih = jnp.concatenate([wih_f, wih_b], axis=1)                # [Din, 8H]
    bias = jnp.concatenate([b_f, b_b], axis=0)                   # [8H]
    xp = matmul_bias(x.reshape(T * B, Din), wih, bias).reshape(T, B, 8 * H)

    whh = jnp.stack([whh_f, whh_b]).astype(jnp.bfloat16)         # [2, H, 4H]
    h2 = _bilstm_call(xp, whh, T=T, B=B, H=H)                    # [2, T, B, H]
    return jnp.concatenate([h2[0], h2[1]], axis=-1)              # [T, B, 2H]


# ----------------------------------------------------------------------------
# Conv2d = channels-last im2col + tiled Pallas matmul (fused bias/residual/ReLU)
# ----------------------------------------------------------------------------
def conv2d_nhwc(x, w, b, *, stride=1, pad=1, relu=True, residual=None):
    """x: NHWC, w: [Cout, Cin, KH, KW] (PyTorch layout), b: [Cout].  Returns NHWC."""
    N, H, W, C = x.shape
    Cout, Cin, KH, KW = w.shape
    assert C == Cin
    xpad = jnp.pad(x, ((0, 0), (pad, pad), (pad, pad), (0, 0)))
    OH = (H + 2 * pad - KH) // stride + 1
    OW = (W + 2 * pad - KW) // stride + 1

    cols = []
    for i in range(KH):
        for j in range(KW):
            cols.append(xpad[:, i:i + stride * OH:stride, j:j + stride * OW:stride, :])
    # Last-axis layout (kh, kw, c) -- matches wmat below; no 5-D stack / transpose.
    patches = jnp.concatenate(cols, axis=-1).reshape(N * OH * OW, KH * KW * C)
    wmat = w.transpose(2, 3, 1, 0).reshape(KH * KW * Cin, Cout)

    res_flat = None
    if residual is not None:
        res_flat = residual.reshape(N * OH * OW, Cout)

    out = matmul_bias(patches, wmat, b, res=res_flat, relu=relu)
    return out.reshape(N, OH, OW, Cout)


# ----------------------------------------------------------------------------
# Parameter construction (deterministic)
# ----------------------------------------------------------------------------
def _uniform(key, shape, fan_in):
    bound = 1.0 / math.sqrt(fan_in)
    return jax.random.uniform(key, shape, jnp.float32, -bound, bound)


def init_params(key, in_ch, cnn_ch1, input_size, hidden_size, embedding_size):
    keys = iter(jax.random.split(key, 64))
    p = {}

    # --- simplified ResNet18-ish CNN ---
    p["conv1_w"] = _uniform(next(keys), (cnn_ch1, in_ch, 3, 3), in_ch * 9)
    p["conv1_b"] = _uniform(next(keys), (cnn_ch1,), in_ch * 9)
    p["conv2_w"] = _uniform(next(keys), (input_size, cnn_ch1, 3, 3), cnn_ch1 * 9)
    p["conv2_b"] = _uniform(next(keys), (input_size,), cnn_ch1 * 9)
    p["res_w1"] = _uniform(next(keys), (input_size, input_size, 3, 3), input_size * 9)
    p["res_b1"] = _uniform(next(keys), (input_size,), input_size * 9)
    p["res_w2"] = _uniform(next(keys), (input_size, input_size, 3, 3), input_size * 9)
    p["res_b2"] = _uniform(next(keys), (input_size,), input_size * 9)

    # --- bidirectional LSTMs (PyTorch param shapes, gate order i,f,g,o) ---
    def lstm_params(din, H):
        d = {}
        for direction in ("fwd", "bwd"):
            d[direction] = {
                "Wih": _uniform(next(keys), (4 * H, din), H),
                "Whh": _uniform(next(keys), (4 * H, H), H),
                "bih": _uniform(next(keys), (4 * H,), H),
                "bhh": _uniform(next(keys), (4 * H,), H),
            }
        return d

    p["lstm1"] = lstm_params(input_size, hidden_size)
    p["lstm2"] = lstm_params(2 * hidden_size, hidden_size)

    # --- final Linear ---
    p["lin_w"] = _uniform(next(keys), (embedding_size, 2 * hidden_size), 2 * hidden_size)
    p["lin_b"] = _uniform(next(keys), (embedding_size,), 2 * hidden_size)
    return p


# ----------------------------------------------------------------------------
# Encoder forward
# ----------------------------------------------------------------------------
def encoder_forward(params, x, *, strides, hidden_size, embedding_size):
    # NCHW -> NHWC once; channels-last throughout the conv trunk.
    xh = x.transpose(0, 2, 3, 1)

    y = conv2d_nhwc(xh, params["conv1_w"], params["conv1_b"],
                    stride=strides[0], pad=1, relu=True)
    y = conv2d_nhwc(y, params["conv2_w"], params["conv2_b"],
                    stride=strides[1], pad=1, relu=True)
    # residual basic block: relu(y + conv2(relu(conv1(y)))) -- add+relu fused in epilogue
    r = conv2d_nhwc(y, params["res_w1"], params["res_b1"], stride=1, pad=1, relu=True)
    conv = conv2d_nhwc(r, params["res_w2"], params["res_b2"],
                       stride=1, pad=1, relu=True, residual=y)

    # --- exact seq2seq reshaping from the PyTorch forward (NCHW semantics) ---
    # PyTorch: (b,c,h,w) -> permute(0,1,3,2) -> view(b,c,h*w) -> permute(2,0,1)
    # i.e. out[t,b,c] = conv[b,c,hh,ww] with t = ww*h + hh; from NHWC:
    b, h, w, c = conv.shape
    seq = conv.transpose(0, 2, 1, 3).reshape(b, w * h, c).transpose(1, 0, 2)  # (T, b, c)

    # --- two bidirectional LSTMs ---
    out = bilstm(seq, params["lstm1"], hidden_size)       # [T, b, 2H]
    out = bilstm(out, params["lstm2"], hidden_size)       # [T, b, 2H]

    # --- final Linear on flattened (T*b, 2H) ---
    T, B, Hh = out.shape
    emb = matmul_bias(out.reshape(T * B, Hh), params["lin_w"].T, params["lin_b"])
    return emb.reshape(T, B, embedding_size)


# ----------------------------------------------------------------------------
if __name__ == "__main__":
    strides = (2, 2)
    batch, in_ch, spatial = 2, 4, 16
    cnn_ch1 = 8
    input_size = 16        # == CNN output channels (LSTM1 input size)
    hidden_size = 16
    embedding_size = 32

    key = jax.random.PRNGKey(0)
    k_param, k_x = jax.random.split(key)
    params = init_params(k_param, in_ch, cnn_ch1, input_size, hidden_size, embedding_size)
    x = jax.random.normal(k_x, (batch, in_ch, spatial, spatial), jnp.float32)

    fwd = jax.jit(functools.partial(
        encoder_forward, strides=strides,
        hidden_size=hidden_size, embedding_size=embedding_size))
    out = jax.block_until_ready(fwd(params, x))

    # conv out: (2, 16, 4, 4) -> T = h*w = 16, so output is (16, 2, 32)
    assert out.shape == (16, batch, embedding_size), out.shape
    assert bool(jnp.all(jnp.isfinite(out)))
    print("KERNEL_OK")
</pallas_src>

<mosaic_0001>
module attributes {stable_mosaic.version = 11 : i64} {
  func.func @_matmul_kernel(%arg0: i32, %arg1: i32, %arg2: i32, %arg3: memref<128x128xbf16, #tpu.memory_space<vmem>>, %arg4: memref<128x128xbf16, #tpu.memory_space<vmem>>, %arg5: memref<1x128xf32, #tpu.memory_space<vmem>>, %arg6: memref<128x128xf32, #tpu.memory_space<vmem>>, %arg7: memref<128x128xf32, #tpu.memory_space<vmem>>) attributes {dimension_semantics = [#tpu.dimension_semantics<parallel>, #tpu.dimension_semantics<parallel>, #tpu.dimension_semantics<arbitrary>], iteration_bounds = array<i64: 1, 1, 1>, scalar_prefetch = 0 : i64, scratch_operands = 1 : i64, tpu.core_type = #tpu.core_type<tc>, window_params = [{transform_indices = @transform_0, window_bounds = array<i64: 128, 128>}, {transform_indices = @transform_1, window_bounds = array<i64: 128, 128>}, {transform_indices = @transform_2, window_bounds = array<i64: 1, 128>}, {transform_indices = @transform_3, window_bounds = array<i64: 128, 128>}]} {
    %c0_i32 = arith.constant 0 : i32
    %0 = arith.cmpi eq, %arg2, %c0_i32 : i32
    %1 = arith.extui %0 : i1 to i32
    %c0_i32_0 = arith.constant 0 : i32
    %2 = arith.cmpi ne, %1, %c0_i32_0 : i32
    scf.if %2 {
      %cst_10 = arith.constant 0.000000e+00 : f32
      %12 = vector.broadcast %cst_10 : f32 to vector<128x128xf32>
      %c0_11 = arith.constant 0 : index
      %c0_12 = arith.constant 0 : index
      %13 = vector.load %arg7[%c0_11, %c0_12] : memref<128x128xf32, #tpu.memory_space<vmem>>, vector<128x128xf32>
      tpu.vector_store %arg7[%c0_11, %c0_12], %12 {strides = array<i32>} : memref<128x128xf32, #tpu.memory_space<vmem>>, vector<128x128xf32>,
    } else {
    }
    %c0 = arith.constant 0 : index
    %c0_1 = arith.constant 0 : index
    %3 = vector.load %arg7[%c0, %c0_1] : memref<128x128xf32, #tpu.memory_space<vmem>>, vector<128x128xf32>
    %c0_2 = arith.constant 0 : index
    %c0_3 = arith.constant 0 : index
    %4 = vector.load %arg3[%c0_2, %c0_3] : memref<128x128xbf16, #tpu.memory_space<vmem>>, vector<128x128xbf16>
    %c0_4 = arith.constant 0 : index
    %c0_5 = arith.constant 0 : index
    %5 = vector.load %arg4[%c0_4, %c0_5] : memref<128x128xbf16, #tpu.memory_space<vmem>>, vector<128x128xbf16>
    %cst = arith.constant dense<0.000000e+00> : vector<128x128xf32>
    %6 = tpu.matmul %4, %5, %cst {dimension_numbers = #tpu.dot_dimension_numbers<[1], [0], [0], [1], [0, 0, 1, 1], [], []>} : vector<128x128xbf16>, vector<128x128xbf16>, vector<128x128xf32> -> vector<128x128xf32>
    %7 = arith.addf %3, %6 : vector<128x128xf32>
    %c0_6 = arith.constant 0 : index
    %c0_7 = arith.constant 0 : index
    %8 = vector.load %arg7[%c0_6, %c0_7] : memref<128x128xf32, #tpu.memory_space<vmem>>, vector<128x128xf32>
    tpu.vector_store %arg7[%c0_6, %c0_7], %7 {strides = array<i32>} : memref<128x128xf32, #tpu.memory_space<vmem>>, vector<128x128xf32>,
    %c0_i32_8 = arith.constant 0 : i32
    %9 = arith.cmpi eq, %arg2, %c0_i32_8 : i32
    %10 = arith.extui %9 : i1 to i32
    %c0_i32_9 = arith.constant 0 : i32
    %11 = arith.cmpi ne, %10, %c0_i32_9 : i32
    scf.if %11 {
      %c0_10 = arith.constant 0 : index
      %c0_11 = arith.constant 0 : index
      %12 = vector.load %arg7[%c0_10, %c0_11] : memref<128x128xf32, #tpu.memory_space<vmem>>, vector<128x128xf32>
      %c0_12 = arith.constant 0 : index
      %c0_13 = arith.constant 0 : index
      %13 = vector.load %arg5[%c0_12, %c0_13] : memref<1x128xf32, #tpu.memory_space<vmem>>, vector<1x128xf32>
      %14 = vector.broadcast %13 : vector<1x128xf32> to vector<128x128xf32>
      %15 = arith.addf %12, %14 : vector<128x128xf32>
      %cst_14 = arith.constant 0.000000e+00 : f32
      %16 = vector.broadcast %cst_14 : f32 to vector<128x128xf32>
      %17 = arith.maximumf %15, %16 : vector<128x128xf32>
      %c0_15 = arith.constant 0 : index
      %c0_16 = arith.constant 0 : index
      %18 = vector.load %arg6[%c0_15, %c0_16] : memref<128x128xf32, #tpu.memory_space<vmem>>, vector<128x128xf32>
      tpu.vector_store %arg6[%c0_15, %c0_16], %17 {strides = array<i32>} : memref<128x128xf32, #tpu.memory_space<vmem>>, vector<128x128xf32>,
    } else {
    }
    return
  }
  func.func @transform_0(%arg0: i32, %arg1: i32, %arg2: i32) -> (i32, i32) {
    %c0_i32 = arith.constant 0 : i32
    return %arg0, %arg2 : i32, i32
  }
  func.func @transform_1(%arg0: i32, %arg1: i32, %arg2: i32) -> (i32, i32) {
    %c0_i32 = arith.constant 0 : i32
    return %arg2, %arg1 : i32, i32
  }
  func.func @transform_2(%arg0: i32, %arg1: i32, %arg2: i32) -> (i32, i32) {
    %c0_i32 = arith.constant 0 : i32
    %c0_i32_0 = arith.constant 0 : i32
    return %c0_i32, %arg1 : i32, i32
  }
  func.func @transform_3(%arg0: i32, %arg1: i32, %arg2: i32) -> (i32, i32) {
    %c0_i32 = arith.constant 0 : i32
    return %arg0, %arg1 : i32, i32
  }
}

module attributes {stable_mosaic.version = 11 : i64} {
  func.func @_matmul_kernel(%arg0: i32, %arg1: i32, %arg2: i32, %arg3: memref<32x128xbf16, #tpu.memory_space<vmem>>, %arg4: memref<128x128xbf16, #tpu.memory_space<vmem>>, %arg5: memref<1x128xf32, #tpu.memory_space<vmem>>, %arg6: memref<32x128xf32, #tpu.memory_space<vmem>>, %arg7: memref<32x128xf32, #tpu.memory_space<vmem>>) attributes {dimension_semantics = [#tpu.dimension_semantics<parallel>, #tpu.dimension_semantics<parallel>, #tpu.dimension_semantics<arbitrary>], iteration_bounds = array<i64: 1, 1, 1>, scalar_prefetch = 0 : i64, scratch_operands = 1 : i64, tpu.core_type = #tpu.core_type<tc>, window_params = [{transform_indices = @transform_0, window_bounds = array<i64: 32, 128>}, {transform_indices = @transform_1, window_bounds = array<i64: 128, 128>}, {transform_indices = @transform_2, window_bounds = array<i64: 1, 128>}, {transform_indices = @transform_3, window_bounds = array<i64: 32, 128>}]} {
    %c0_i32 = arith.constant 0 : i32
    %0 = arith.cmpi eq, %arg2, %c0_i32 : i32
    %1 = arith.extui %0 : i1 to i32
    %c0_i32_0 = arith.constant 0 : i32
    %2 = arith.cmpi ne, %1, %c0_i32_0 : i32
    scf.if %2 {
      %cst_10 = arith.constant 0.000000e+00 : f32
      %12 = vector.broadcast %cst_10 : f32 to vector<32x128xf32>
      %c0_11 = arith.constant 0 : index
      %c0_12 = arith.constant 0 : index
      %13 = vector.load %arg7[%c0_11, %c0_12] : memref<32x128xf32, #tpu.memory_space<vmem>>, vector<32x128xf32>
      tpu.vector_store %arg7[%c0_11, %c0_12], %12 {strides = array<i32>} : memref<32x128xf32, #tpu.memory_space<vmem>>, vector<32x128xf32>,
    } else {
    }
    %c0 = arith.constant 0 : index
    %c0_1 = arith.constant 0 : index
    %3 = vector.load %arg7[%c0, %c0_1] : memref<32x128xf32, #tpu.memory_space<vmem>>, vector<32x128xf32>
    %c0_2 = arith.constant 0 : index
    %c0_3 = arith.constant 0 : index
    %4 = vector.load %arg3[%c0_2, %c0_3] : memref<32x128xbf16, #tpu.memory_space<vmem>>, vector<32x128xbf16>
    %c0_4 = arith.constant 0 : index
    %c0_5 = arith.constant 0 : index
    %5 = vector.load %arg4[%c0_4, %c0_5] : memref<128x128xbf16, #tpu.memory_space<vmem>>, vector<128x128xbf16>
    %cst = arith.constant dense<0.000000e+00> : vector<32x128xf32>
    %6 = tpu.matmul %4, %5, %cst {dimension_numbers = #tpu.dot_dimension_numbers<[1], [0], [0], [1], [0, 0, 1, 1], [], []>} : vector<32x128xbf16>, vector<128x128xbf16>, vector<32x128xf32> -> vector<32x128xf32>
    %7 = arith.addf %3, %6 : vector<32x128xf32>
    %c0_6 = arith.constant 0 : index
    %c0_7 = arith.constant 0 : index
    %8 = vector.load %arg7[%c0_6, %c0_7] : memref<32x128xf32, #tpu.memory_space<vmem>>, vector<32x128xf32>
    tpu.vector_store %arg7[%c0_6, %c0_7], %7 {strides = array<i32>} : memref<32x128xf32, #tpu.memory_space<vmem>>, vector<32x128xf32>,
    %c0_i32_8 = arith.constant 0 : i32
    %9 = arith.cmpi eq, %arg2, %c0_i32_8 : i32
    %10 = arith.extui %9 : i1 to i32
    %c0_i32_9 = arith.constant 0 : i32
    %11 = arith.cmpi ne, %10, %c0_i32_9 : i32
    scf.if %11 {
      %c0_10 = arith.constant 0 : index
      %c0_11 = arith.constant 0 : index
      %12 = vector.load %arg7[%c0_10, %c0_11] : memref<32x128xf32, #tpu.memory_space<vmem>>, vector<32x128xf32>
      %c0_12 = arith.constant 0 : index
      %c0_13 = arith.constant 0 : index
      %13 = vector.load %arg5[%c0_12, %c0_13] : memref<1x128xf32, #tpu.memory_space<vmem>>, vector<1x128xf32>
      %14 = vector.broadcast %13 : vector<1x128xf32> to vector<32x128xf32>
      %15 = arith.addf %12, %14 : vector<32x128xf32>
      %cst_14 = arith.constant 0.000000e+00 : f32
      %16 = vector.broadcast %cst_14 : f32 to vector<32x128xf32>
      %17 = arith.maximumf %15, %16 : vector<32x128xf32>
      %c0_15 = arith.constant 0 : index
      %c0_16 = arith.constant 0 : index
      %18 = vector.load %arg6[%c0_15, %c0_16] : memref<32x128xf32, #tpu.memory_space<vmem>>, vector<32x128xf32>
      tpu.vector_store %arg6[%c0_15, %c0_16], %17 {strides = array<i32>} : memref<32x128xf32, #tpu.memory_space<vmem>>, vector<32x128xf32>,
    } else {
    }
    return
  }
  func.func @transform_0(%arg0: i32, %arg1: i32, %arg2: i32) -> (i32, i32) {
    %c0_i32 = arith.constant 0 : i32
    return %arg0, %arg2 : i32, i32
  }
  func.func @transform_1(%arg0: i32, %arg1: i32, %arg2: i32) -> (i32, i32) {
    %c0_i32 = arith.constant 0 : i32
    return %arg2, %arg1 : i32, i32
  }
  func.func @transform_2(%arg0: i32, %arg1: i32, %arg2: i32) -> (i32, i32) {
    %c0_i32 = arith.constant 0 : i32
    %c0_i32_0 = arith.constant 0 : i32
    return %c0_i32, %arg1 : i32, i32
  }
  func.func @transform_3(%arg0: i32, %arg1: i32, %arg2: i32) -> (i32, i32) {
    %c0_i32 = arith.constant 0 : i32
    return %arg0, %arg1 : i32, i32
  }
}

module attributes {stable_mosaic.version = 11 : i64} {
  func.func @_matmul_kernel(%arg0: i32, %arg1: i32, %arg2: i32, %arg3: memref<32x256xbf16, #tpu.memory_space<vmem>>, %arg4: memref<256x128xbf16, #tpu.memory_space<vmem>>, %arg5: memref<1x128xf32, #tpu.memory_space<vmem>>, %arg6: memref<32x128xf32, #tpu.memory_space<vmem>>, %arg7: memref<32x128xf32, #tpu.memory_space<vmem>>) attributes {dimension_semantics = [#tpu.dimension_semantics<parallel>, #tpu.dimension_semantics<parallel>, #tpu.dimension_semantics<arbitrary>], iteration_bounds = array<i64: 1, 1, 1>, scalar_prefetch = 0 : i64, scratch_operands = 1 : i64, tpu.core_type = #tpu.core_type<tc>, window_params = [{transform_indices = @transform_0, window_bounds = array<i64: 32, 256>}, {transform_indices = @transform_1, window_bounds = array<i64: 256, 128>}, {transform_indices = @transform_2, window_bounds = array<i64: 1, 128>}, {transform_indices = @transform_3, window_bounds = array<i64: 32, 128>}]} {
    %c0_i32 = arith.constant 0 : i32
    %0 = arith.cmpi eq, %arg2, %c0_i32 : i32
    %1 = arith.extui %0 : i1 to i32
    %c0_i32_0 = arith.constant 0 : i32
    %2 = arith.cmpi ne, %1, %c0_i32_0 : i32
    scf.if %2 {
      %cst_10 = arith.constant 0.000000e+00 : f32
      %12 = vector.broadcast %cst_10 : f32 to vector<32x128xf32>
      %c0_11 = arith.constant 0 : index
      %c0_12 = arith.constant 0 : index
      %13 = vector.load %arg7[%c0_11, %c0_12] : memref<32x128xf32, #tpu.memory_space<vmem>>, vector<32x128xf32>
      tpu.vector_store %arg7[%c0_11, %c0_12], %12 {strides = array<i32>} : memref<32x128xf32, #tpu.memory_space<vmem>>, vector<32x128xf32>,
    } else {
    }
    %c0 = arith.constant 0 : index
    %c0_1 = arith.constant 0 : index
    %3 = vector.load %arg7[%c0, %c0_1] : memref<32x128xf32, #tpu.memory_space<vmem>>, vector<32x128xf32>
    %c0_2 = arith.constant 0 : index
    %c0_3 = arith.constant 0 : index
    %4 = vector.load %arg3[%c0_2, %c0_3] : memref<32x256xbf16, #tpu.memory_space<vmem>>, vector<32x256xbf16>
    %c0_4 = arith.constant 0 : index
    %c0_5 = arith.constant 0 : index
    %5 = vector.load %arg4[%c0_4, %c0_5] : memref<256x128xbf16, #tpu.memory_space<vmem>>, vector<256x128xbf16>
    %cst = arith.constant dense<0.000000e+00> : vector<32x128xf32>
    %6 = tpu.matmul %4, %5, %cst {dimension_numbers = #tpu.dot_dimension_numbers<[1], [0], [0], [1], [0, 0, 1, 1], [], []>} : vector<32x256xbf16>, vector<256x128xbf16>, vector<32x128xf32> -> vector<32x128xf32>
    %7 = arith.addf %3, %6 : vector<32x128xf32>
    %c0_6 = arith.constant 0 : index
    %c0_7 = arith.constant 0 : index
    %8 = vector.load %arg7[%c0_6, %c0_7] : memref<32x128xf32, #tpu.memory_space<vmem>>, vector<32x128xf32>
    tpu.vector_store %arg7[%c0_6, %c0_7], %7 {strides = array<i32>} : memref<32x128xf32, #tpu.memory_space<vmem>>, vector<32x128xf32>,
    %c0_i32_8 = arith.constant 0 : i32
    %9 = arith.cmpi eq, %arg2, %c0_i32_8 : i32
    %10 = arith.extui %9 : i1 to i32
    %c0_i32_9 = arith.constant 0 : i32
    %11 = arith.cmpi ne, %10, %c0_i32_9 : i32
    scf.if %11 {
      %c0_10 = arith.constant 0 : index
      %c0_11 = arith.constant 0 : index
      %12 = vector.load %arg7[%c0_10, %c0_11] : memref<32x128xf32, #tpu.memory_space<vmem>>, vector<32x128xf32>
      %c0_12 = arith.constant 0 : index
      %c0_13 = arith.constant 0 : index
      %13 = vector.load %arg5[%c0_12, %c0_13] : memref<1x128xf32, #tpu.memory_space<vmem>>, vector<1x128xf32>
      %14 = vector.broadcast %13 : vector<1x128xf32> to vector<32x128xf32>
      %15 = arith.addf %12, %14 : vector<32x128xf32>
      %cst_14 = arith.constant 0.000000e+00 : f32
      %16 = vector.broadcast %cst_14 : f32 to vector<32x128xf32>
      %17 = arith.maximumf %15, %16 : vector<32x128xf32>
      %c0_15 = arith.constant 0 : index
      %c0_16 = arith.constant 0 : index
      %18 = vector.load %arg6[%c0_15, %c0_16] : memref<32x128xf32, #tpu.memory_space<vmem>>, vector<32x128xf32>
      tpu.vector_store %arg6[%c0_15, %c0_16], %17 {strides = array<i32>} : memref<32x128xf32, #tpu.memory_space<vmem>>, vector<32x128xf32>,
    } else {
    }
    return
  }
  func.func @transform_0(%arg0: i32, %arg1: i32, %arg2: i32) -> (i32, i32) {
    %c0_i32 = arith.constant 0 : i32
    return %arg0, %arg2 : i32, i32
  }
  func.func @transform_1(%arg0: i32, %arg1: i32, %arg2: i32) -> (i32, i32) {
    %c0_i32 = arith.constant 0 : i32
    return %arg2, %arg1 : i32, i32
  }
  func.func @transform_2(%arg0: i32, %arg1: i32, %arg2: i32) -> (i32, i32) {
    %c0_i32 = arith.constant 0 : i32
    %c0_i32_0 = arith.constant 0 : i32
    return %c0_i32, %arg1 : i32, i32
  }
  func.func @transform_3(%arg0: i32, %arg1: i32, %arg2: i32) -> (i32, i32) {
    %c0_i32 = arith.constant 0 : i32
    return %arg0, %arg1 : i32, i32
  }
}

module attributes {stable_mosaic.version = 11 : i64} {
  func.func @_matmul_kernel(%arg0: i32, %arg1: i32, %arg2: i32, %arg3: memref<32x256xbf16, #tpu.memory_space<vmem>>, %arg4: memref<256x128xbf16, #tpu.memory_space<vmem>>, %arg5: memref<1x128xf32, #tpu.memory_space<vmem>>, %arg6: memref<32x128xf32, #tpu.memory_space<vmem>>, %arg7: memref<32x128xf32, #tpu.memory_space<vmem>>, %arg8: memref<32x128xf32, #tpu.memory_space<vmem>>) attributes {dimension_semantics = [#tpu.dimension_semantics<parallel>, #tpu.dimension_semantics<parallel>, #tpu.dimension_semantics<arbitrary>], iteration_bounds = array<i64: 1, 1, 1>, scalar_prefetch = 0 : i64, scratch_operands = 1 : i64, tpu.core_type = #tpu.core_type<tc>, window_params = [{transform_indices = @transform_0, window_bounds = array<i64: 32, 256>}, {transform_indices = @transform_1, window_bounds = array<i64: 256, 128>}, {transform_indices = @transform_2, window_bounds = array<i64: 1, 128>}, {transform_indices = @transform_3, window_bounds = array<i64: 32, 128>}, {transform_indices = @transform_4, window_bounds = array<i64: 32, 128>}]} {
    %c0_i32 = arith.constant 0 : i32
    %0 = arith.cmpi eq, %arg2, %c0_i32 : i32
    %1 = arith.extui %0 : i1 to i32
    %c0_i32_0 = arith.constant 0 : i32
    %2 = arith.cmpi ne, %1, %c0_i32_0 : i32
    scf.if %2 {
      %cst_10 = arith.constant 0.000000e+00 : f32
      %12 = vector.broadcast %cst_10 : f32 to vector<32x128xf32>
      %c0_11 = arith.constant 0 : index
      %c0_12 = arith.constant 0 : index
      %13 = vector.load %arg8[%c0_11, %c0_12] : memref<32x128xf32, #tpu.memory_space<vmem>>, vector<32x128xf32>
      tpu.vector_store %arg8[%c0_11, %c0_12], %12 {strides = array<i32>} : memref<32x128xf32, #tpu.memory_space<vmem>>, vector<32x128xf32>,
    } else {
    }
    %c0 = arith.constant 0 : index
    %c0_1 = arith.constant 0 : index
    %3 = vector.load %arg8[%c0, %c0_1] : memref<32x128xf32, #tpu.memory_space<vmem>>, vector<32x128xf32>
    %c0_2 = arith.constant 0 : index
    %c0_3 = arith.constant 0 : index
    %4 = vector.load %arg3[%c0_2, %c0_3] : memref<32x256xbf16, #tpu.memory_space<vmem>>, vector<32x256xbf16>
    %c0_4 = arith.constant 0 : index
    %c0_5 = arith.constant 0 : index
    %5 = vector.load %arg4[%c0_4, %c0_5] : memref<256x128xbf16, #tpu.memory_space<vmem>>, vector<256x128xbf16>
    %cst = arith.constant dense<0.000000e+00> : vector<32x128xf32>
    %6 = tpu.matmul %4, %5, %cst {dimension_numbers = #tpu.dot_dimension_numbers<[1], [0], [0], [1], [0, 0, 1, 1], [], []>} : vector<32x256xbf16>, vector<256x128xbf16>, vector<32x128xf32> -> vector<32x128xf32>
    %7 = arith.addf %3, %6 : vector<32x128xf32>
    %c0_6 = arith.constant 0 : index
    %c0_7 = arith.constant 0 : index
    %8 = vector.load %arg8[%c0_6, %c0_7] : memref<32x128xf32, #tpu.memory_space<vmem>>, vector<32x128xf32>
    tpu.vector_store %arg8[%c0_6, %c0_7], %7 {strides = array<i32>} : memref<32x128xf32, #tpu.memory_space<vmem>>, vector<32x128xf32>,
    %c0_i32_8 = arith.constant 0 : i32
    %9 = arith.cmpi eq, %arg2, %c0_i32_8 : i32
    %10 = arith.extui %9 : i1 to i32
    %c0_i32_9 = arith.constant 0 : i32
    %11 = arith.cmpi ne, %10, %c0_i32_9 : i32
    scf.if %11 {
      %c0_10 = arith.constant 0 : index
      %c0_11 = arith.constant 0 : index
      %12 = vector.load %arg8[%c0_10, %c0_11] : memref<32x128xf32, #tpu.memory_space<vmem>>, vector<32x128xf32>
      %c0_12 = arith.constant 0 : index
      %c0_13 = arith.constant 0 : index
      %13 = vector.load %arg5[%c0_12, %c0_13] : memref<1x128xf32, #tpu.memory_space<vmem>>, vector<1x128xf32>
      %14 = vector.broadcast %13 : vector<1x128xf32> to vector<32x128xf32>
      %15 = arith.addf %12, %14 : vector<32x128xf32>
      %c0_14 = arith.constant 0 : index
      %c0_15 = arith.constant 0 : index
      %16 = vector.load %arg6[%c0_14, %c0_15] : memref<32x128xf32, #tpu.memory_space<vmem>>, vector<32x128xf32>
      %17 = arith.addf %15, %16 : vector<32x128xf32>
      %cst_16 = arith.constant 0.000000e+00 : f32
      %18 = vector.broadcast %cst_16 : f32 to vector<32x128xf32>
      %19 = arith.maximumf %17, %18 : vector<32x128xf32>
      %c0_17 = arith.constant 0 : index
      %c0_18 = arith.constant 0 : index
      %20 = vector.load %arg7[%c0_17, %c0_18] : memref<32x128xf32, #tpu.memory_space<vmem>>, vector<32x128xf32>
      tpu.vector_store %arg7[%c0_17, %c0_18], %19 {strides = array<i32>} : memref<32x128xf32, #tpu.memory_space<vmem>>, vector<32x128xf32>,
    } else {
    }
    return
  }
  func.func @transform_0(%arg0: i32, %arg1: i32, %arg2: i32) -> (i32, i32) {
    %c0_i32 = arith.constant 0 : i32
    return %arg0, %arg2 : i32, i32
  }
  func.func @transform_1(%arg0: i32, %arg1: i32, %arg2: i32) -> (i32, i32) {
    %c0_i32 = arith.constant 0 : i32
    return %arg2, %arg1 : i32, i32
  }
  func.func @transform_2(%arg0: i32, %arg1: i32, %arg2: i32) -> (i32, i32) {
    %c0_i32 = arith.constant 0 : i32
    %c0_i32_0 = arith.constant 0 : i32
    return %c0_i32, %arg1 : i32, i32
  }
  func.func @transform_3(%arg0: i32, %arg1: i32, %arg2: i32) -> (i32, i32) {
    %c0_i32 = arith.constant 0 : i32
    return %arg0, %arg1 : i32, i32
  }
  func.func @transform_4(%arg0: i32, %arg1: i32, %arg2: i32) -> (i32, i32) {
    %c0_i32 = arith.constant 0 : i32
    return %arg0, %arg1 : i32, i32
  }
}

module attributes {stable_mosaic.version = 11 : i64} {
  func.func @_matmul_kernel(%arg0: i32, %arg1: i32, %arg2: i32, %arg3: memref<32x128xbf16, #tpu.memory_space<vmem>>, %arg4: memref<128x128xbf16, #tpu.memory_space<vmem>>, %arg5: memref<1x128xf32, #tpu.memory_space<vmem>>, %arg6: memref<32x128xf32, #tpu.memory_space<vmem>>, %arg7: memref<32x128xf32, #tpu.memory_space<vmem>>) attributes {dimension_semantics = [#tpu.dimension_semantics<parallel>, #tpu.dimension_semantics<parallel>, #tpu.dimension_semantics<arbitrary>], iteration_bounds = array<i64: 1, 1, 1>, scalar_prefetch = 0 : i64, scratch_operands = 1 : i64, tpu.core_type = #tpu.core_type<tc>, window_params = [{transform_indices = @transform_0, window_bounds = array<i64: 32, 128>}, {transform_indices = @transform_1, window_bounds = array<i64: 128, 128>}, {transform_indices = @transform_2, window_bounds = array<i64: 1, 128>}, {transform_indices = @transform_3, window_bounds = array<i64: 32, 128>}]} {
    %c0_i32 = arith.constant 0 : i32
    %0 = arith.cmpi eq, %arg2, %c0_i32 : i32
    %1 = arith.extui %0 : i1 to i32
    %c0_i32_0 = arith.constant 0 : i32
    %2 = arith.cmpi ne, %1, %c0_i32_0 : i32
    scf.if %2 {
      %cst_10 = arith.constant 0.000000e+00 : f32
      %12 = vector.broadcast %cst_10 : f32 to vector<32x128xf32>
      %c0_11 = arith.constant 0 : index
      %c0_12 = arith.constant 0 : index
      %13 = vector.load %arg7[%c0_11, %c0_12] : memref<32x128xf32, #tpu.memory_space<vmem>>, vector<32x128xf32>
      tpu.vector_store %arg7[%c0_11, %c0_12], %12 {strides = array<i32>} : memref<32x128xf32, #tpu.memory_space<vmem>>, vector<32x128xf32>,
    } else {
    }
    %c0 = arith.constant 0 : index
    %c0_1 = arith.constant 0 : index
    %3 = vector.load %arg7[%c0, %c0_1] : memref<32x128xf32, #tpu.memory_space<vmem>>, vector<32x128xf32>
    %c0_2 = arith.constant 0 : index
    %c0_3 = arith.constant 0 : index
    %4 = vector.load %arg3[%c0_2, %c0_3] : memref<32x128xbf16, #tpu.memory_space<vmem>>, vector<32x128xbf16>
    %c0_4 = arith.constant 0 : index
    %c0_5 = arith.constant 0 : index
    %5 = vector.load %arg4[%c0_4, %c0_5] : memref<128x128xbf16, #tpu.memory_space<vmem>>, vector<128x128xbf16>
    %cst = arith.constant dense<0.000000e+00> : vector<32x128xf32>
    %6 = tpu.matmul %4, %5, %cst {dimension_numbers = #tpu.dot_dimension_numbers<[1], [0], [0], [1], [0, 0, 1, 1], [], []>} : vector<32x128xbf16>, vector<128x128xbf16>, vector<32x128xf32> -> vector<32x128xf32>
    %7 = arith.addf %3, %6 : vector<32x128xf32>
    %c0_6 = arith.constant 0 : index
    %c0_7 = arith.constant 0 : index
    %8 = vector.load %arg7[%c0_6, %c0_7] : memref<32x128xf32, #tpu.memory_space<vmem>>, vector<32x128xf32>
    tpu.vector_store %arg7[%c0_6, %c0_7], %7 {strides = array<i32>} : memref<32x128xf32, #tpu.memory_space<vmem>>, vector<32x128xf32>,
    %c0_i32_8 = arith.constant 0 : i32
    %9 = arith.cmpi eq, %arg2, %c0_i32_8 : i32
    %10 = arith.extui %9 : i1 to i32
    %c0_i32_9 = arith.constant 0 : i32
    %11 = arith.cmpi ne, %10, %c0_i32_9 : i32
    scf.if %11 {
      %c0_10 = arith.constant 0 : index
      %c0_11 = arith.constant 0 : index
      %12 = vector.load %arg7[%c0_10, %c0_11] : memref<32x128xf32, #tpu.memory_space<vmem>>, vector<32x128xf32>
      %c0_12 = arith.constant 0 : index
      %c0_13 = arith.constant 0 : index
      %13 = vector.load %arg5[%c0_12, %c0_13] : memref<1x128xf32, #tpu.memory_space<vmem>>, vector<1x128xf32>
      %14 = vector.broadcast %13 : vector<1x128xf32> to vector<32x128xf32>
      %15 = arith.addf %12, %14 : vector<32x128xf32>
      %c0_14 = arith.constant 0 : index
      %c0_15 = arith.constant 0 : index
      %16 = vector.load %arg6[%c0_14, %c0_15] : memref<32x128xf32, #tpu.memory_space<vmem>>, vector<32x128xf32>
      tpu.vector_store %arg6[%c0_14, %c0_15], %15 {strides = array<i32>} : memref<32x128xf32, #tpu.memory_space<vmem>>, vector<32x128xf32>,
    } else {
    }
    return
  }
  func.func @transform_0(%arg0: i32, %arg1: i32, %arg2: i32) -> (i32, i32) {
    %c0_i32 = arith.constant 0 : i32
    return %arg0, %arg2 : i32, i32
  }
  func.func @transform_1(%arg0: i32, %arg1: i32, %arg2: i32) -> (i32, i32) {
    %c0_i32 = arith.constant 0 : i32
    return %arg2, %arg1 : i32, i32
  }
  func.func @transform_2(%arg0: i32, %arg1: i32, %arg2: i32) -> (i32, i32) {
    %c0_i32 = arith.constant 0 : i32
    %c0_i32_0 = arith.constant 0 : i32
    return %c0_i32, %arg1 : i32, i32
  }
  func.func @transform_3(%arg0: i32, %arg1: i32, %arg2: i32) -> (i32, i32) {
    %c0_i32 = arith.constant 0 : i32
    return %arg0, %arg1 : i32, i32
  }
}

module attributes {stable_mosaic.version = 11 : i64} {
  func.func @_bilstm_kernel(%arg0: i32, %arg1: memref<16x2x128xf32, #tpu.memory_space<vmem>>, %arg2: memref<1x16x64xbf16, #tpu.memory_space<vmem>>, %arg3: memref<1x16x2x16xf32, #tpu.memory_space<vmem>>) attributes {dimension_semantics = [#tpu.dimension_semantics<parallel>], iteration_bounds = array<i64: 2>, scalar_prefetch = 0 : i64, scratch_operands = 0 : i64, tpu.core_type = #tpu.core_type<tc>, window_params = [{pipeline_mode = #tpu.pipeline_mode<synchronous>, transform_indices = @transform_0, window_bounds = array<i64: 16, 2, 128>}, {transform_indices = @transform_1, window_bounds = array<i64: 1, 16, 64>}, {transform_indices = @transform_2, window_bounds = array<i64: 1, 16, 2, 16>}]} {
    %c0 = arith.constant 0 : index
    %c0_0 = arith.constant 0 : index
    %c0_1 = arith.constant 0 : index
    %0 = vector.load %arg2[%c0, %c0_0, %c0_1] : memref<1x16x64xbf16, #tpu.memory_space<vmem>>, vector<1x16x64xbf16>
    %1 = vector.shape_cast %0 : vector<1x16x64xbf16> to vector<16x64xbf16>
    %cst = arith.constant 0.000000e+00 : f32
    %2 = vector.broadcast %cst : f32 to vector<2x16xf32>
    %c0_i32 = arith.constant 0 : i32
    %c16_i32 = arith.constant 16 : i32
    %3 = arith.addi %c0_i32, %c16_i32 : i32
    %c1_i32 = arith.constant 1 : i32
    %4:2 = scf.for %arg4 = %c0_i32 to %3 step %c1_i32 iter_args(%arg5 = %2, %arg6 = %2) -> (vector<2x16xf32>, vector<2x16xf32>)  : i32 {
      %c0_i32_3 = arith.constant 0 : i32
      %5 = arith.cmpi eq, %arg0, %c0_i32_3 : i32
      %c15_i32 = arith.constant 15 : i32
      %6 = arith.subi %c15_i32, %arg4 : i32
      %7 = arith.select %5, %arg4, %6 : i32
      %8 = arith.index_cast %7 : i32 to index
      %c0_4 = arith.constant 0 : index
      %c0_5 = arith.constant 0 : index
      %9 = vector.load %arg1[%8, %c0_4, %c0_5] : memref<16x2x128xf32, #tpu.memory_space<vmem>>, vector<1x2x128xf32>
      %10 = vector.shape_cast %9 : vector<1x2x128xf32> to vector<2x128xf32>
      %c0_i32_6 = arith.constant 0 : i32
      %11 = arith.cmpi eq, %arg0, %c0_i32_6 : i32
      %12 = vector.extract_strided_slice %10 {offsets = [0, 0], sizes = [2, 64], strides = [1, 1]} : vector<2x128xf32> to vector<2x64xf32>
      %13 = vector.extract_strided_slice %10 {offsets = [0, 64], sizes = [2, 64], strides = [1, 1]} : vector<2x128xf32> to vector<2x64xf32>
      %14 = arith.select %11, %12, %13 : vector<2x64xf32>
      %15 = arith.truncf %arg5 : vector<2x16xf32> to vector<2x16xbf16>
      %cst_7 = arith.constant dense<0.000000e+00> : vector<2x64xf32>
      %16 = tpu.matmul %15, %1, %cst_7 {dimension_numbers = #tpu.dot_dimension_numbers<[1], [0], [0], [1], [0, 0, 1, 1], [], []>} : vector<2x16xbf16>, vector<16x64xbf16>, vector<2x64xf32> -> vector<2x64xf32>
      %17 = arith.addf %14, %16 : vector<2x64xf32>
      %18 = vector.extract_strided_slice %17 {offsets = [0, 0], sizes = [2, 48], strides = [1, 1]} : vector<2x64xf32> to vector<2x48xf32>
      %19 = arith.negf %18 : vector<2x48xf32>
      %20 = math.exp %19 : vector<2x48xf32>
      %cst_8 = arith.constant 1.000000e+00 : f32
      %21 = vector.broadcast %cst_8 : f32 to vector<2x48xf32>
      %22 = arith.addf %21, %20 : vector<2x48xf32>
      %23 = arith.divf %21, %22 : vector<2x48xf32>
      %24 = vector.extract_strided_slice %23 {offsets = [0, 0], sizes = [2, 16], strides = [1, 1]} : vector<2x48xf32> to vector<2x16xf32>
      %25 = vector.extract_strided_slice %23 {offsets = [0, 16], sizes = [2, 16], strides = [1, 1]} : vector<2x48xf32> to vector<2x16xf32>
      %26 = vector.extract_strided_slice %23 {offsets = [0, 32], sizes = [2, 16], strides = [1, 1]} : vector<2x48xf32> to vector<2x16xf32>
      %27 = vector.extract_strided_slice %17 {offsets = [0, 48], sizes = [2, 16], strides = [1, 1]} : vector<2x64xf32> to vector<2x16xf32>
      %28 = math.tanh %27 : vector<2x16xf32>
      %29 = arith.mulf %25, %arg6 : vector<2x16xf32>
      %30 = arith.mulf %24, %28 : vector<2x16xf32>
      %31 = arith.addf %29, %30 : vector<2x16xf32>
      %32 = math.tanh %31 : vector<2x16xf32>
      %33 = arith.mulf %26, %32 : vector<2x16xf32>
      %c0_9 = arith.constant 0 : index
      %34 = arith.index_cast %7 : i32 to index
      %c0_10 = arith.constant 0 : index
      %c0_11 = arith.constant 0 : index
      %35 = vector.load %arg3[%c0_9, %34, %c0_10, %c0_11] : memref<1x16x2x16xf32, #tpu.memory_space<vmem>>, vector<1x1x2x16xf32>
      %36 = vector.shape_cast %35 : vector<1x1x2x16xf32> to vector<2x16xf32>
      %37 = vector.shape_cast %33 : vector<2x16xf32> to vector<1x1x2x16xf32>
      tpu.vector_store %arg3[%c0_9, %34, %c0_10, %c0_11], %37 {strides = array<i32>} : memref<1x16x2x16xf32, #tpu.memory_space<vmem>>, vector<1x1x2x16xf32>,
      scf.yield %33, %31 : vector<2x16xf32>, vector<2x16xf32>
    }
    %c16_i32_2 = arith.constant 16 : i32
    return
  }
  func.func @transform_0(%arg0: i32) -> (i32, i32, i32) {
    %c0_i32 = arith.constant 0 : i32
    %c0_i32_0 = arith.constant 0 : i32
    %c0_i32_1 = arith.constant 0 : i32
    %c0_i32_2 = arith.constant 0 : i32
    return %c0_i32, %c0_i32_0, %c0_i32_1 : i32, i32, i32
  }
  func.func @transform_1(%arg0: i32) -> (i32, i32, i32) {
    %c0_i32 = arith.constant 0 : i32
    %c0_i32_0 = arith.constant 0 : i32
    %c0_i32_1 = arith.constant 0 : i32
    return %arg0, %c0_i32, %c0_i32_0 : i32, i32, i32
  }
  func.func @transform_2(%arg0: i32) -> (i32, i32, i32, i32) {
    %c0_i32 = arith.constant 0 : i32
    %c0_i32_0 = arith.constant 0 : i32
    %c0_i32_1 = arith.constant 0 : i32
    %c0_i32_2 = arith.constant 0 : i32
    return %arg0, %c0_i32, %c0_i32_0, %c0_i32_1 : i32, i32, i32, i32
  }
}

module attributes {stable_mosaic.version = 11 : i64} {
  func.func @_matmul_kernel(%arg0: i32, %arg1: i32, %arg2: i32, %arg3: memref<32x128xbf16, #tpu.memory_space<vmem>>, %arg4: memref<128x128xbf16, #tpu.memory_space<vmem>>, %arg5: memref<1x128xf32, #tpu.memory_space<vmem>>, %arg6: memref<32x128xf32, #tpu.memory_space<vmem>>, %arg7: memref<32x128xf32, #tpu.memory_space<vmem>>) attributes {dimension_semantics = [#tpu.dimension_semantics<parallel>, #tpu.dimension_semantics<parallel>, #tpu.dimension_semantics<arbitrary>], iteration_bounds = array<i64: 1, 1, 1>, scalar_prefetch = 0 : i64, scratch_operands = 1 : i64, tpu.core_type = #tpu.core_type<tc>, window_params = [{transform_indices = @transform_0, window_bounds = array<i64: 32, 128>}, {transform_indices = @transform_1, window_bounds = array<i64: 128, 128>}, {transform_indices = @transform_2, window_bounds = array<i64: 1, 128>}, {transform_indices = @transform_3, window_bounds = array<i64: 32, 128>}]} {
    %c0_i32 = arith.constant 0 : i32
    %0 = arith.cmpi eq, %arg2, %c0_i32 : i32
    %1 = arith.extui %0 : i1 to i32
    %c0_i32_0 = arith.constant 0 : i32
    %2 = arith.cmpi ne, %1, %c0_i32_0 : i32
    scf.if %2 {
      %cst_10 = arith.constant 0.000000e+00 : f32
      %12 = vector.broadcast %cst_10 : f32 to vector<32x128xf32>
      %c0_11 = arith.constant 0 : index
      %c0_12 = arith.constant 0 : index
      %13 = vector.load %arg7[%c0_11, %c0_12] : memref<32x128xf32, #tpu.memory_space<vmem>>, vector<32x128xf32>
      tpu.vector_store %arg7[%c0_11, %c0_12], %12 {strides = array<i32>} : memref<32x128xf32, #tpu.memory_space<vmem>>, vector<32x128xf32>,
    } else {
    }
    %c0 = arith.constant 0 : index
    %c0_1 = arith.constant 0 : index
    %3 = vector.load %arg7[%c0, %c0_1] : memref<32x128xf32, #tpu.memory_space<vmem>>, vector<32x128xf32>
    %c0_2 = arith.constant 0 : index
    %c0_3 = arith.constant 0 : index
    %4 = vector.load %arg3[%c0_2, %c0_3] : memref<32x128xbf16, #tpu.memory_space<vmem>>, vector<32x128xbf16>
    %c0_4 = arith.constant 0 : index
    %c0_5 = arith.constant 0 : index
    %5 = vector.load %arg4[%c0_4, %c0_5] : memref<128x128xbf16, #tpu.memory_space<vmem>>, vector<128x128xbf16>
    %cst = arith.constant dense<0.000000e+00> : vector<32x128xf32>
    %6 = tpu.matmul %4, %5, %cst {dimension_numbers = #tpu.dot_dimension_numbers<[1], [0], [0], [1], [0, 0, 1, 1], [], []>} : vector<32x128xbf16>, vector<128x128xbf16>, vector<32x128xf32> -> vector<32x128xf32>
    %7 = arith.addf %3, %6 : vector<32x128xf32>
    %c0_6 = arith.constant 0 : index
    %c0_7 = arith.constant 0 : index
    %8 = vector.load %arg7[%c0_6, %c0_7] : memref<32x128xf32, #tpu.memory_space<vmem>>, vector<32x128xf32>
    tpu.vector_store %arg7[%c0_6, %c0_7], %7 {strides = array<i32>} : memref<32x128xf32, #tpu.memory_space<vmem>>, vector<32x128xf32>,
    %c0_i32_8 = arith.constant 0 : i32
    %9 = arith.cmpi eq, %arg2, %c0_i32_8 : i32
    %10 = arith.extui %9 : i1 to i32
    %c0_i32_9 = arith.constant 0 : i32
    %11 = arith.cmpi ne, %10, %c0_i32_9 : i32
    scf.if %11 {
      %c0_10 = arith.constant 0 : index
      %c0_11 = arith.constant 0 : index
      %12 = vector.load %arg7[%c0_10, %c0_11] : memref<32x128xf32, #tpu.memory_space<vmem>>, vector<32x128xf32>
      %c0_12 = arith.constant 0 : index
      %c0_13 = arith.constant 0 : index
      %13 = vector.load %arg5[%c0_12, %c0_13] : memref<1x128xf32, #tpu.memory_space<vmem>>, vector<1x128xf32>
      %14 = vector.broadcast %13 : vector<1x128xf32> to vector<32x128xf32>
      %15 = arith.addf %12, %14 : vector<32x128xf32>
      %c0_14 = arith.constant 0 : index
      %c0_15 = arith.constant 0 : index
      %16 = vector.load %arg6[%c0_14, %c0_15] : memref<32x128xf32, #tpu.memory_space<vmem>>, vector<32x128xf32>
      tpu.vector_store %arg6[%c0_14, %c0_15], %15 {strides = array<i32>} : memref<32x128xf32, #tpu.memory_space<vmem>>, vector<32x128xf32>,
    } else {
    }
    return
  }
  func.func @transform_0(%arg0: i32, %arg1: i32, %arg2: i32) -> (i32, i32) {
    %c0_i32 = arith.constant 0 : i32
    return %arg0, %arg2 : i32, i32
  }
  func.func @transform_1(%arg0: i32, %arg1: i32, %arg2: i32) -> (i32, i32) {
    %c0_i32 = arith.constant 0 : i32
    return %arg2, %arg1 : i32, i32
  }
  func.func @transform_2(%arg0: i32, %arg1: i32, %arg2: i32) -> (i32, i32) {
    %c0_i32 = arith.constant 0 : i32
    %c0_i32_0 = arith.constant 0 : i32
    return %c0_i32, %arg1 : i32, i32
  }
  func.func @transform_3(%arg0: i32, %arg1: i32, %arg2: i32) -> (i32, i32) {
    %c0_i32 = arith.constant 0 : i32
    return %arg0, %arg1 : i32, i32
  }
}

</mosaic_0001>

<llo_original>
// kernel: encoder_forward.9
$region0: #{encoder_forward.9}
  #allocation0 [shape = 'u32[]', space=smem, size = 0x4, offset = 0x4, fixed_abs, tag = 'smem constant byte address 0x4 - core index']
  #allocation1 [shape = 'u32[144,128]{1,0:T(1,128)}', space=vmem, size = 0x12000, scoped, tag = 'internal scratch']
  #allocation2 [shape = 'f32[128,128]{1,0:T(8,128)}', space=vmem, size = 0x10000, scoped, tag = 'scratch operand']
  %s0 = inlined_call_operand.vmem [shape: bf16[128,128], index: 0, kind: input, shape index: {}]
  %s1 = inlined_call_operand.vmem [shape: bf16[128,128], index: 1, kind: input, shape index: {}]
  %s2 = inlined_call_operand.vmem [shape: f32[1,128], index: 2, kind: input, shape index: {}]
  %s3 = inlined_call_operand.vmem [shape: f32[128,128], index: 3, kind: output, shape index: {}]
  %s4 = sld [smem:[#allocation0]]
  $region30: #{encoder_forward.9} parent=0
    _
  %s6 = ssub.s32 1, %s4
  %s7 = scalar_select 0, %s6, %s4
  // Predicated region
  $region2: #{encoder_forward.9} parent=0 // pred_check
    _
  $region3: #{encoder_forward.9} parent=0 // pred_check_branch
    %9 = sbr.rel (0) target = $region5
  $region4: #{encoder_forward.9} parent=0 // pred_region
    _
  $region5: #{encoder_forward.9} parent=0 // pred_fallthru
    _
  // Predicated region
  $region6: #{encoder_forward.9} parent=0 // pred_check
    _
  $region7: #{encoder_forward.9} parent=0 // pred_check_branch
    %11 = sbr.rel (0) target = $region9
  $region8: #{encoder_forward.9} parent=0 // pred_region
    _
  $region9: #{encoder_forward.9} parent=0 // pred_fallthru
    _
  // Predicated region
  $region10: #{encoder_forward.9} parent=0 // pred_check
    _
  $region11: #{encoder_forward.9} parent=0 // pred_check_branch
    %13 = sbr.rel (0) target = $region13
  $region12: #{encoder_forward.9} parent=0 // pred_region
    _
  $region13: #{encoder_forward.9} parent=0 // pred_fallthru
    _
  %p15 = scmp.eq.s32.totalorder 0, 0
  // Predicated region
  $region14: #{encoder_forward.9} parent=0 // pred_check
    %p16 = pneg %p15
  $region15: #{encoder_forward.9} parent=0 // pred_check_branch
    %18 = sbr.rel (%p16) target = $region17
  $region16: #{encoder_forward.9} parent=0 // pred_region
    %19 = vst [vmem:[#allocation2] sm:$0xff] 0.0
    %20 = vst [vmem:[#allocation2 + $0x8] sm:$0xff] 0.0
    %21 = vst [vmem:[#allocation2 + $0x10] sm:$0xff] 0.0
    %22 = vst [vmem:[#allocation2 + $0x18] sm:$0xff] 0.0
    %23 = vst [vmem:[#allocation2 + $0x20] sm:$0xff] 0.0
    %24 = vst [vmem:[#allocation2 + $0x28] sm:$0xff] 0.0
    %25 = vst [vmem:[#allocation2 + $0x30] sm:$0xff] 0.0
    %26 = vst [vmem:[#allocation2 + $0x38] sm:$0xff] 0.0
    %27 = vst [vmem:[#allocation2 + $0x40] sm:$0xff] 0.0
    %28 = vst [vmem:[#allocation2 + $0x48] sm:$0xff] 0.0
    %29 = vst [vmem:[#allocation2 + $0x50] sm:$0xff] 0.0
    %30 = vst [vmem:[#allocation2 + $0x58] sm:$0xff] 0.0
    %31 = vst [vmem:[#allocation2 + $0x60] sm:$0xff] 0.0
    %32 = vst [vmem:[#allocation2 + $0x68] sm:$0xff] 0.0
    %33 = vst [vmem:[#allocation2 + $0x70] sm:$0xff] 0.0
    %34 = vst [vmem:[#allocation2 + $0x78] sm:$0xff] 0.0
  $region17: #{encoder_forward.9} parent=0 // pred_fallthru
    _
  %v35 = vld [vmem:[#allocation2] sm:$0xff]
  %v36 = vld [vmem:[#allocation2 + $0x8] sm:$0xff]
  %v37 = vld [vmem:[#allocation2 + $0x10] sm:$0xff]
  %v38 = vld [vmem:[#allocation2 + $0x18] sm:$0xff]
  %v39 = vld [vmem:[#allocation2 + $0x20] sm:$0xff]
  %v40 = vld [vmem:[#allocation2 + $0x28] sm:$0xff]
  %v41 = vld [vmem:[#allocation2 + $0x30] sm:$0xff]
  %v42 = vld [vmem:[#allocation2 + $0x38] sm:$0xff]
  %v43 = vld [vmem:[#allocation2 + $0x40] sm:$0xff]
  %v44 = vld [vmem:[#allocation2 + $0x48] sm:$0xff]
  %v45 = vld [vmem:[#allocation2 + $0x50] sm:$0xff]
  %v46 = vld [vmem:[#allocation2 + $0x58] sm:$0xff]
  %v47 = vld [vmem:[#allocation2 + $0x60] sm:$0xff]
  %v48 = vld [vmem:[#allocation2 + $0x68] sm:$0xff]
  %v49 = vld [vmem:[#allocation2 + $0x70] sm:$0xff]
  %v50 = vld [vmem:[#allocation2 + $0x78] sm:$0xff]
  %v51 = vld [vmem:[%s0] sm:$0xf]
  %v52 = vld [vmem:[%s0 + $0x4] sm:$0xf]
  %v53 = vld [vmem:[%s0 + $0x8] sm:$0xf]
  %v54 = vld [vmem:[%s0 + $0xc] sm:$0xf]
  %v55 = vld [vmem:[%s0 + $0x10] sm:$0xf]
  %v56 = vld [vmem:[%s0 + $0x14] sm:$0xf]
  %v57 = vld [vmem:[%s0 + $0x18] sm:$0xf]
  %v58 = vld [vmem:[%s0 + $0x1c] sm:$0xf]
  %v59 = vld [vmem:[%s0 + $0x20] sm:$0xf]
  %v60 = vld [vmem:[%s0 + $0x24] sm:$0xf]
  %v61 = vld [vmem:[%s0 + $0x28] sm:$0xf]
  %v62 = vld [vmem:[%s0 + $0x2c] sm:$0xf]
  %v63 = vld [vmem:[%s0 + $0x30] sm:$0xf]
  %v64 = vld [vmem:[%s0 + $0x34] sm:$0xf]
  %v65 = vld [vmem:[%s0 + $0x38] sm:$0xf]
  %v66 = vld [vmem:[%s0 + $0x3c] sm:$0xf]
  %v67 = vld [vmem:[%s1] sm:$0xf]
  %v68 = vld [vmem:[%s1 + $0x4] sm:$0xf]
  %v69 = vld [vmem:[%s1 + $0x8] sm:$0xf]
  %v70 = vld [vmem:[%s1 + $0xc] sm:$0xf]
  %v71 = vld [vmem:[%s1 + $0x10] sm:$0xf]
  %v72 = vld [vmem:[%s1 + $0x14] sm:$0xf]
  %v73 = vld [vmem:[%s1 + $0x18] sm:$0xf]
  %v74 = vld [vmem:[%s1 + $0x1c] sm:$0xf]
  %v75 = vld [vmem:[%s1 + $0x20] sm:$0xf]
  %v76 = vld [vmem:[%s1 + $0x24] sm:$0xf]
  %v77 = vld [vmem:[%s1 + $0x28] sm:$0xf]
  %v78 = vld [vmem:[%s1 + $0x2c] sm:$0xf]
  %v79 = vld [vmem:[%s1 + $0x30] sm:$0xf]
  %v80 = vld [vmem:[%s1 + $0x34] sm:$0xf]
  %v81 = vld [vmem:[%s1 + $0x38] sm:$0xf]
  %v82 = vld [vmem:[%s1 + $0x3c] sm:$0xf]
  %v99 = vunpack.c.l.b16 %v51
  %v100 = vunpack.c.l.b16 %v52
  %v101 = vunpack.c.l.b16 %v53
  %v102 = vunpack.c.l.b16 %v54
  %v103 = vunpack.c.l.b16 %v55
  %v104 = vunpack.c.l.b16 %v56
  %v105 = vunpack.c.l.b16 %v57
  %v106 = vunpack.c.l.b16 %v58
  %v107 = vunpack.c.l.b16 %v59
  %v108 = vunpack.c.l.b16 %v60
  %v109 = vunpack.c.l.b16 %v61
  %v110 = vunpack.c.l.b16 %v62
  %v111 = vunpack.c.l.b16 %v63
  %v112 = vunpack.c.l.b16 %v64
  %v113 = vunpack.c.l.b16 %v65
  %v114 = vunpack.c.l.b16 %v66
  %v115 = vpack.c.b16 %v100, %v99
  %v116 = vpack.c.b16 %v102, %v101
  %v117 = vpack.c.b16 %v104, %v103
  %v118 = vpack.c.b16 %v106, %v105
  %v119 = vpack.c.b16 %v108, %v107
  %v120 = vpack.c.b16 %v110, %v109
  %v121 = vpack.c.b16 %v112, %v111
  %v122 = vpack.c.b16 %v114, %v113
  %v147 = vunpack.c.l.b16 %v67
  %v148 = vunpack.c.l.b16 %v68
  %v149 = vunpack.c.l.b16 %v69
  %v150 = vunpack.c.l.b16 %v70
  %v151 = vunpack.c.l.b16 %v71
  %v152 = vunpack.c.l.b16 %v72
  %v153 = vunpack.c.l.b16 %v73
  %v154 = vunpack.c.l.b16 %v74
  %v155 = vunpack.c.l.b16 %v75
  %v156 = vunpack.c.l.b16 %v76
  %v157 = vunpack.c.l.b16 %v77
  %v158 = vunpack.c.l.b16 %v78
  %v159 = vunpack.c.l.b16 %v79
  %v160 = vunpack.c.l.b16 %v80
  %v161 = vunpack.c.l.b16 %v81
  %v162 = vunpack.c.l.b16 %v82
  %v163 = vpack.c.b16 %v148, %v147
  %v164 = vpack.c.b16 %v150, %v149
  %v165 = vpack.c.b16 %v152, %v151
  %v166 = vpack.c.b16 %v154, %v153
  %v167 = vpack.c.b16 %v156, %v155
  %v168 = vpack.c.b16 %v158, %v157
  %v169 = vpack.c.b16 %v160, %v159
  %v170 = vpack.c.b16 %v162, %v161
  %179 = vmatprep.subr.bf16.mxu0 0
  %180 = vmatpush1.bf16.msra.mxu0 %v163
  %181 = vmatprep.subr.bf16.mxu0 0
  %182 = vmatpush1.bf16.msra.mxu0 %v164
  %183 = vmatprep.subr.bf16.mxu0 0
  %184 = vmatpush1.bf16.msra.mxu0 %v165
  %185 = vmatprep.subr.bf16.mxu0 0
  %186 = vmatpush1.bf16.msra.mxu0 %v166
  %187 = vmatprep.subr.bf16.mxu0 0
  %188 = vmatpush1.bf16.msra.mxu0 %v167
  %189 = vmatprep.subr.bf16.mxu0 0
  %190 = vmatpush1.bf16.msra.mxu0 %v168
  %191 = vmatprep.subr.bf16.mxu0 0
  %192 = vmatpush1.bf16.msra.mxu0 %v169
  %193 = vmatprep.subr.bf16.mxu0 0
  %194 = vmatpush1.bf16.msra.mxu0 %v170
  %195 = vmatprep.subr.bf16.mxu0 0
  %196 = vmatpush1.bf16.msra.mxu0 0
  %197 = vmatprep.subr.bf16.mxu0 0
  %198 = vmatpush1.bf16.msra.mxu0 0
  %199 = vmatprep.subr.bf16.mxu0 0
  %200 = vmatpush1.bf16.msra.mxu0 0
  %201 = vmatprep.subr.bf16.mxu0 0
  %202 = vmatpush1.bf16.msra.mxu0 0
  %203 = vmatprep.subr.bf16.mxu0 0
  %204 = vmatpush1.bf16.msra.mxu0 0
  %205 = vmatprep.subr.bf16.mxu0 0
  %206 = vmatpush1.bf16.msra.mxu0 0
  %207 = vmatprep.subr.bf16.mxu0 0
  %208 = vmatpush1.bf16.msra.mxu0 0
  %209 = vmatprep.subr.bf16.mxu0 0
  %210 = vmatpush1.bf16.msra.mxu0 0
  %211 = vmatprep.mubr.bf16.mxu0 0
  %212 = vmatmul.mubr.bf16.gmra.mrb[0].mxu0 %v115
  %v213 = vpop.f32.mrb[0].mxu0
  %v214 = vadd.f32 0.0, %v213
  %v215 = vpop.f32.mrb[0].mxu0
  %v216 = vpop.f32.mrb[0].mxu0
  %v217 = vadd.f32 0.0, %v216
  %v218 = vpop.f32.mrb[0].mxu0
  %219 = vmatprep.mubr.bf16.mxu0 0
  %220 = vmatmul.mubr.bf16.gmra.mrb[0].mxu0 %v116
  %v221 = vpop.f32.mrb[0].mxu0
  %v222 = vadd.f32 0.0, %v221
  %v223 = vpop.f32.mrb[0].mxu0
  %v224 = vpop.f32.mrb[0].mxu0
  %v225 = vadd.f32 0.0, %v224
  %v226 = vpop.f32.mrb[0].mxu0
  %227 = vmatprep.mubr.bf16.mxu0 0
  %228 = vmatmul.mubr.bf16.gmra.mrb[0].mxu0 %v117
  %v229 = vpop.f32.mrb[0].mxu0
  %v230 = vadd.f32 0.0, %v229
  %v231 = vpop.f32.mrb[0].mxu0
  %v232 = vpop.f32.mrb[0].mxu0
  %v233 = vadd.f32 0.0, %v232
  %v234 = vpop.f32.mrb[0].mxu0
  %235 = vmatprep.mubr.bf16.mxu0 0
  %236 = vmatmul.mubr.bf16.gmra.mrb[0].mxu0 %v118
  %v237 = vpop.f32.mrb[0].mxu0
  %v238 = vadd.f32 0.0, %v237
  %v239 = vpop.f32.mrb[0].mxu0
  %v240 = vpop.f32.mrb[0].mxu0
  %v241 = vadd.f32 0.0, %v240
  %v242 = vpop.f32.mrb[0].mxu0
  %243 = vmatprep.mubr.bf16.mxu0 0
  %244 = vmatmul.mubr.bf16.gmra.mrb[0].mxu0 %v119
  %v245 = vpop.f32.mrb[0].mxu0
  %v246 = vadd.f32 0.0, %v245
  %v247 = vpop.f32.mrb[0].mxu0
  %v248 = vpop.f32.mrb[0].mxu0
  %v249 = vadd.f32 0.0, %v248
  %v250 = vpop.f32.mrb[0].mxu0
  %251 = vmatprep.mubr.bf16.mxu0 0
  %252 = vmatmul.mubr.bf16.gmra.mrb[0].mxu0 %v120
  %v253 = vpop.f32.mrb[0].mxu0
  %v254 = vadd.f32 0.0, %v253
  %v255 = vpop.f32.mrb[0].mxu0
  %v256 = vpop.f32.mrb[0].mxu0
  %v257 = vadd.f32 0.0, %v256
  %v258 = vpop.f32.mrb[0].mxu0
  %259 = vmatprep.mubr.bf16.mxu0 0
  %260 = vmatmul.mubr.bf16.gmra.mrb[0].mxu0 %v121
  %v261 = vpop.f32.mrb[0].mxu0
  %v262 = vadd.f32 0.0, %v261
  %v263 = vpop.f32.mrb[0].mxu0
  %v264 = vpop.f32.mrb[0].mxu0
  %v265 = vadd.f32 0.0, %v264
  %v266 = vpop.f32.mrb[0].mxu0
  %267 = vmatprep.mubr.bf16.mxu0 0
  %268 = vmatmul.mubr.bf16.gmra.mrb[0].mxu0 %v122
  %v269 = vpop.f32.mrb[0].mxu0
  %v270 = vadd.f32 0.0, %v269
  %v271 = vpop.f32.mrb[0].mxu0
  %v272 = vpop.f32.mrb[0].mxu0
  %v273 = vadd.f32 0.0, %v272
  %v274 = vpop.f32.mrb[0].mxu0
  %275 = vdwg.mxu0
  %v276 = vadd.f32 %v35, %v214
  %v277 = vadd.f32 %v36, %v217
  %v278 = vadd.f32 %v37, %v222
  %v279 = vadd.f32 %v38, %v225
  %v280 = vadd.f32 %v39, %v230
  %v281 = vadd.f32 %v40, %v233
  %v282 = vadd.f32 %v41, %v238
  %v283 = vadd.f32 %v42, %v241
  %v284 = vadd.f32 %v43, %v246
  %v285 = vadd.f32 %v44, %v249
  %v286 = vadd.f32 %v45, %v254
  %v287 = vadd.f32 %v46, %v257
  %v288 = vadd.f32 %v47, %v262
  %v289 = vadd.f32 %v48, %v265
  %v290 = vadd.f32 %v49, %v270
  %v291 = vadd.f32 %v50, %v273
  %292 = vst [vmem:[#allocation2] sm:$0xff] %v276
  %293 = vst [vmem:[#allocation2 + $0x8] sm:$0xff] %v277
  %294 = vst [vmem:[#allocation2 + $0x10] sm:$0xff] %v278
  %295 = vst [vmem:[#allocation2 + $0x18] sm:$0xff] %v279
  %296 = vst [vmem:[#allocation2 + $0x20] sm:$0xff] %v280
  %297 = vst [vmem:[#allocation2 + $0x28] sm:$0xff] %v281
  %298 = vst [vmem:[#allocation2 + $0x30] sm:$0xff] %v282
  %299 = vst [vmem:[#allocation2 + $0x38] sm:$0xff] %v283
  %300 = vst [vmem:[#allocation2 + $0x40] sm:$0xff] %v284
  %301 = vst [vmem:[#allocation2 + $0x48] sm:$0xff] %v285
  %302 = vst [vmem:[#allocation2 + $0x50] sm:$0xff] %v286
  %303 = vst [vmem:[#allocation2 + $0x58] sm:$0xff] %v287
  %304 = vst [vmem:[#allocation2 + $0x60] sm:$0xff] %v288
  %305 = vst [vmem:[#allocation2 + $0x68] sm:$0xff] %v289
  %306 = vst [vmem:[#allocation2 + $0x70] sm:$0xff] %v290
  %307 = vst [vmem:[#allocation2 + $0x78] sm:$0xff] %v291
  // Predicated region
  $region18: #{encoder_forward.9} parent=0 // pred_check
    %p308 = pneg %p15
  $region19: #{encoder_forward.9} parent=0 // pred_check_branch
    %310 = sbr.rel (%p308) target = $region21
  $region20: #{encoder_forward.9} parent=0 // pred_region
    %v311 = vld [vmem:[#allocation2] sm:$0xff]
    %v312 = vld [vmem:[#allocation2 + $0x8] sm:$0xff]
    %v313 = vld [vmem:[#allocation2 + $0x10] sm:$0xff]
    %v314 = vld [vmem:[#allocation2 + $0x18] sm:$0xff]
    %v315 = vld [vmem:[#allocation2 + $0x20] sm:$0xff]
    %v316 = vld [vmem:[#allocation2 + $0x28] sm:$0xff]
    %v317 = vld [vmem:[#allocation2 + $0x30] sm:$0xff]
    %v318 = vld [vmem:[#allocation2 + $0x38] sm:$0xff]
    %v319 = vld [vmem:[#allocation2 + $0x40] sm:$0xff]
    %v320 = vld [vmem:[#allocation2 + $0x48] sm:$0xff]
    %v321 = vld [vmem:[#allocation2 + $0x50] sm:$0xff]
    %v322 = vld [vmem:[#allocation2 + $0x58] sm:$0xff]
    %v323 = vld [vmem:[#allocation2 + $0x60] sm:$0xff]
    %v324 = vld [vmem:[#allocation2 + $0x68] sm:$0xff]
    %v325 = vld [vmem:[#allocation2 + $0x70] sm:$0xff]
    %v326 = vld [vmem:[#allocation2 + $0x78] sm:$0xff]
    %v327 = vld [vmem:[%s2] sm:$0x1]
    %v329 = vlaneseq
    %v330 = vshrl.u32 %v329, 7
    %v331 = vsub.s32 0, %v330
    %v332 = vrot.slane %v327, %v331
    %v334 = vadd.f32 %v311, %v332
    %v335 = vadd.f32 %v312, %v332
    %v336 = vadd.f32 %v313, %v332
    %v337 = vadd.f32 %v314, %v332
    %v338 = vadd.f32 %v315, %v332
    %v339 = vadd.f32 %v316, %v332
    %v340 = vadd.f32 %v317, %v332
    %v341 = vadd.f32 %v318, %v332
    %v342 = vadd.f32 %v319, %v332
    %v343 = vadd.f32 %v320, %v332
    %v344 = vadd.f32 %v321, %v332
    %v345 = vadd.f32 %v322, %v332
    %v346 = vadd.f32 %v323, %v332
    %v347 = vadd.f32 %v324, %v332
    %v348 = vadd.f32 %v325, %v332
    %v349 = vadd.f32 %v326, %v332
    %v350 = vmax.f32 %v334, 0.0
    %v351 = vmax.f32 %v335, 0.0
    %v352 = vmax.f32 %v336, 0.0
    %v353 = vmax.f32 %v337, 0.0
    %v354 = vmax.f32 %v338, 0.0
    %v355 = vmax.f32 %v339, 0.0
    %v356 = vmax.f32 %v340, 0.0
    %v357 = vmax.f32 %v341, 0.0
    %v358 = vmax.f32 %v342, 0.0
    %v359 = vmax.f32 %v343, 0.0
    %v360 = vmax.f32 %v344, 0.0
    %v361 = vmax.f32 %v345, 0.0
    %v362 = vmax.f32 %v346, 0.0
    %v363 = vmax.f32 %v347, 0.0
    %v364 = vmax.f32 %v348, 0.0
    %v365 = vmax.f32 %v349, 0.0
    %366 = vst [vmem:[%s3] sm:$0xff] %v350
    %367 = vst [vmem:[%s3 + $0x8] sm:$0xff] %v351
    %368 = vst [vmem:[%s3 + $0x10] sm:$0xff] %v352
    %369 = vst [vmem:[%s3 + $0x18] sm:$0xff] %v353
    %370 = vst [vmem:[%s3 + $0x20] sm:$0xff] %v354
    %371 = vst [vmem:[%s3 + $0x28] sm:$0xff] %v355
    %372 = vst [vmem:[%s3 + $0x30] sm:$0xff] %v356
    %373 = vst [vmem:[%s3 + $0x38] sm:$0xff] %v357
    %374 = vst [vmem:[%s3 + $0x40] sm:$0xff] %v358
    %375 = vst [vmem:[%s3 + $0x48] sm:$0xff] %v359
    %376 = vst [vmem:[%s3 + $0x50] sm:$0xff] %v360
    %377 = vst [vmem:[%s3 + $0x58] sm:$0xff] %v361
    %378 = vst [vmem:[%s3 + $0x60] sm:$0xff] %v362
    %379 = vst [vmem:[%s3 + $0x68] sm:$0xff] %v363
    %380 = vst [vmem:[%s3 + $0x70] sm:$0xff] %v364
    %381 = vst [vmem:[%s3 + $0x78] sm:$0xff] %v365
  $region21: #{encoder_forward.9} parent=0 // pred_fallthru
    _
  // Predicated region
  $region22: #{encoder_forward.9} parent=0 // pred_check
    _
  $region23: #{encoder_forward.9} parent=0 // pred_check_branch
    %383 = sbr.rel (0) target = $region25
  $region24: #{encoder_forward.9} parent=0 // pred_region
    _
  $region25: #{encoder_forward.9} parent=0 // pred_fallthru
    _
  // Predicated region
  $region26: #{encoder_forward.9} parent=0 // pred_check
    _
  $region27: #{encoder_forward.9} parent=0 // pred_check_branch
    %385 = sbr.rel (0) target = $region29
  $region28: #{encoder_forward.9} parent=0 // pred_region
    _
  $region29: #{encoder_forward.9} parent=0 // pred_fallthru
    _

// kernel: encoder_forward.10
$region0: #{encoder_forward.10}
  #allocation0 [shape = 'u32[]', space=smem, size = 0x4, offset = 0x4, fixed_abs, tag = 'smem constant byte address 0x4 - core index']
  #allocation1 [shape = 'u32[144,128]{1,0:T(1,128)}', space=vmem, size = 0x12000, scoped, tag = 'internal scratch']
  #allocation2 [shape = 'f32[32,128]{1,0:T(8,128)}', space=vmem, size = 0x4000, scoped, tag = 'scratch operand']
  %s0 = inlined_call_operand.vmem [shape: bf16[32,128], index: 0, kind: input, shape index: {}]
  %s1 = inlined_call_operand.vmem [shape: bf16[128,128], index: 1, kind: input, shape index: {}]
  %s2 = inlined_call_operand.vmem [shape: f32[1,128], index: 2, kind: input, shape index: {}]
  %s3 = inlined_call_operand.vmem [shape: f32[32,128], index: 3, kind: output, shape index: {}]
  %s4 = sld [smem:[#allocation0]]
  $region30: #{encoder_forward.10} parent=0
    _
  %s6 = ssub.s32 1, %s4
  %s7 = scalar_select 0, %s6, %s4
  // Predicated region
  $region2: #{encoder_forward.10} parent=0 // pred_check
    _
  $region3: #{encoder_forward.10} parent=0 // pred_check_branch
    %9 = sbr.rel (0) target = $region5
  $region4: #{encoder_forward.10} parent=0 // pred_region
    _
  $region5: #{encoder_forward.10} parent=0 // pred_fallthru
    _
  // Predicated region
  $region6: #{encoder_forward.10} parent=0 // pred_check
    _
  $region7: #{encoder_forward.10} parent=0 // pred_check_branch
    %11 = sbr.rel (0) target = $region9
  $region8: #{encoder_forward.10} parent=0 // pred_region
    _
  $region9: #{encoder_forward.10} parent=0 // pred_fallthru
    _
  // Predicated region
  $region10: #{encoder_forward.10} parent=0 // pred_check
    _
  $region11: #{encoder_forward.10} parent=0 // pred_check_branch
    %13 = sbr.rel (0) target = $region13
  $region12: #{encoder_forward.10} parent=0 // pred_region
    _
  $region13: #{encoder_forward.10} parent=0 // pred_fallthru
    _
  %p15 = scmp.eq.s32.totalorder 0, 0
  // Predicated region
  $region14: #{encoder_forward.10} parent=0 // pred_check
    %p16 = pneg %p15
  $region15: #{encoder_forward.10} parent=0 // pred_check_branch
    %18 = sbr.rel (%p16) target = $region17
  $region16: #{encoder_forward.10} parent=0 // pred_region
    %19 = vst [vmem:[#allocation2] sm:$0xff] 0.0
    %20 = vst [vmem:[#allocation2 + $0x8] sm:$0xff] 0.0
    %21 = vst [vmem:[#allocation2 + $0x10] sm:$0xff] 0.0
    %22 = vst [vmem:[#allocation2 + $0x18] sm:$0xff] 0.0
  $region17: #{encoder_forward.10} parent=0 // pred_fallthru
    _
  %v23 = vld [vmem:[#allocation2] sm:$0xff]
  %v24 = vld [vmem:[#allocation2 + $0x8] sm:$0xff]
  %v25 = vld [vmem:[#allocation2 + $0x10] sm:$0xff]
  %v26 = vld [vmem:[#allocation2 + $0x18] sm:$0xff]
  %v27 = vld [vmem:[%s0] sm:$0xf]
  %v28 = vld [vmem:[%s0 + $0x4] sm:$0xf]
  %v29 = vld [vmem:[%s0 + $0x8] sm:$0xf]
  %v30 = vld [vmem:[%s0 + $0xc] sm:$0xf]
  %v31 = vld [vmem:[%s1] sm:$0xf]
  %v32 = vld [vmem:[%s1 + $0x4] sm:$0xf]
  %v33 = vld [vmem:[%s1 + $0x8] sm:$0xf]
  %v34 = vld [vmem:[%s1 + $0xc] sm:$0xf]
  %v35 = vld [vmem:[%s1 + $0x10] sm:$0xf]
  %v36 = vld [vmem:[%s1 + $0x14] sm:$0xf]
  %v37 = vld [vmem:[%s1 + $0x18] sm:$0xf]
  %v38 = vld [vmem:[%s1 + $0x1c] sm:$0xf]
  %v39 = vld [vmem:[%s1 + $0x20] sm:$0xf]
  %v40 = vld [vmem:[%s1 + $0x24] sm:$0xf]
  %v41 = vld [vmem:[%s1 + $0x28] sm:$0xf]
  %v42 = vld [vmem:[%s1 + $0x2c] sm:$0xf]
  %v43 = vld [vmem:[%s1 + $0x30] sm:$0xf]
  %v44 = vld [vmem:[%s1 + $0x34] sm:$0xf]
  %v45 = vld [vmem:[%s1 + $0x38] sm:$0xf]
  %v46 = vld [vmem:[%s1 + $0x3c] sm:$0xf]
  %v51 = vunpack.c.l.b16 %v27
  %v52 = vunpack.c.l.b16 %v28
  %v53 = vunpack.c.l.b16 %v29
  %v54 = vunpack.c.l.b16 %v30
  %v55 = vpack.c.b16 %v52, %v51
  %v56 = vpack.c.b16 %v54, %v53
  %v75 = vunpack.c.l.b16 %v31
  %v76 = vunpack.c.l.b16 %v32
  %v77 = vunpack.c.l.b16 %v33
  %v78 = vunpack.c.l.b16 %v34
  %v79 = vunpack.c.l.b16 %v35
  %v80 = vunpack.c.l.b16 %v36
  %v81 = vunpack.c.l.b16 %v37
  %v82 = vunpack.c.l.b16 %v38
  %v83 = vunpack.c.l.b16 %v39
  %v84 = vunpack.c.l.b16 %v40
  %v85 = vunpack.c.l.b16 %v41
  %v86 = vunpack.c.l.b16 %v42
  %v87 = vunpack.c.l.b16 %v43
  %v88 = vunpack.c.l.b16 %v44
  %v89 = vunpack.c.l.b16 %v45
  %v90 = vunpack.c.l.b16 %v46
  %v91 = vpack.c.b16 %v76, %v75
  %v92 = vpack.c.b16 %v78, %v77
  %v93 = vpack.c.b16 %v80, %v79
  %v94 = vpack.c.b16 %v82, %v81
  %v95 = vpack.c.b16 %v84, %v83
  %v96 = vpack.c.b16 %v86, %v85
  %v97 = vpack.c.b16 %v88, %v87
  %v98 = vpack.c.b16 %v90, %v89
  %107 = vmatprep.subr.bf16.mxu0 0
  %108 = vmatpush1.bf16.msra.mxu0 %v91
  %109 = vmatprep.subr.bf16.mxu0 0
  %110 = vmatpush1.bf16.msra.mxu0 %v92
  %111 = vmatprep.subr.bf16.mxu0 0
  %112 = vmatpush1.bf16.msra.mxu0 %v93
  %113 = vmatprep.subr.bf16.mxu0 0
  %114 = vmatpush1.bf16.msra.mxu0 %v94
  %115 = vmatprep.subr.bf16.mxu0 0
  %116 = vmatpush1.bf16.msra.mxu0 %v95
  %117 = vmatprep.subr.bf16.mxu0 0
  %118 = vmatpush1.bf16.msra.mxu0 %v96
  %119 = vmatprep.subr.bf16.mxu0 0
  %120 = vmatpush1.bf16.msra.mxu0 %v97
  %121 = vmatprep.subr.bf16.mxu0 0
  %122 = vmatpush1.bf16.msra.mxu0 %v98
  %123 = vmatprep.subr.bf16.mxu0 0
  %124 = vmatpush1.bf16.msra.mxu0 0
  %125 = vmatprep.subr.bf16.mxu0 0
  %126 = vmatpush1.bf16.msra.mxu0 0
  %127 = vmatprep.subr.bf16.mxu0 0
  %128 = vmatpush1.bf16.msra.mxu0 0
  %129 = vmatprep.subr.bf16.mxu0 0
  %130 = vmatpush1.bf16.msra.mxu0 0
  %131 = vmatprep.subr.bf16.mxu0 0
  %132 = vmatpush1.bf16.msra.mxu0 0
  %133 = vmatprep.subr.bf16.mxu0 0
  %134 = vmatpush1.bf16.msra.mxu0 0
  %135 = vmatprep.subr.bf16.mxu0 0
  %136 = vmatpush1.bf16.msra.mxu0 0
  %137 = vmatprep.subr.bf16.mxu0 0
  %138 = vmatpush1.bf16.msra.mxu0 0
  %139 = vmatprep.mubr.bf16.mxu0 0
  %140 = vmatmul.mubr.bf16.gmra.mrb[0].mxu0 %v55
  %v141 = vpop.f32.mrb[0].mxu0
  %v142 = vadd.f32 0.0, %v141
  %v143 = vpop.f32.mrb[0].mxu0
  %v144 = vpop.f32.mrb[0].mxu0
  %v145 = vadd.f32 0.0, %v144
  %v146 = vpop.f32.mrb[0].mxu0
  %147 = vmatprep.mubr.bf16.mxu0 0
  %148 = vmatmul.mubr.bf16.gmra.mrb[0].mxu0 %v56
  %v149 = vpop.f32.mrb[0].mxu0
  %v150 = vadd.f32 0.0, %v149
  %v151 = vpop.f32.mrb[0].mxu0
  %v152 = vpop.f32.mrb[0].mxu0
  %v153 = vadd.f32 0.0, %v152
  %v154 = vpop.f32.mrb[0].mxu0
  %155 = vdwg.mxu0
  %v156 = vadd.f32 %v23, %v142
  %v157 = vadd.f32 %v24, %v145
  %v158 = vadd.f32 %v25, %v150
  %v159 = vadd.f32 %v26, %v153
  %160 = vst [vmem:[#allocation2] sm:$0xff] %v156
  %161 = vst [vmem:[#allocation2 + $0x8] sm:$0xff] %v157
  %162 = vst [vmem:[#allocation2 + $0x10] sm:$0xff] %v158
  %163 = vst [vmem:[#allocation2 + $0x18] sm:$0xff] %v159
  // Predicated region
  $region18: #{encoder_forward.10} parent=0 // pred_check
    %p164 = pneg %p15
  $region19: #{encoder_forward.10} parent=0 // pred_check_branch
    %166 = sbr.rel (%p164) target = $region21
  $region20: #{encoder_forward.10} parent=0 // pred_region
    %v167 = vld [vmem:[#allocation2] sm:$0xff]
    %v168 = vld [vmem:[#allocation2 + $0x8] sm:$0xff]
    %v169 = vld [vmem:[#allocation2 + $0x10] sm:$0xff]
    %v170 = vld [vmem:[#allocation2 + $0x18] sm:$0xff]
    %v171 = vld [vmem:[%s2] sm:$0x1]
    %v173 = vlaneseq
    %v174 = vshrl.u32 %v173, 7
    %v175 = vsub.s32 0, %v174
    %v176 = vrot.slane %v171, %v175
    %v178 = vadd.f32 %v167, %v176
    %v179 = vadd.f32 %v168, %v176
    %v180 = vadd.f32 %v169, %v176
    %v181 = vadd.f32 %v170, %v176
    %v182 = vmax.f32 %v178, 0.0
    %v183 = vmax.f32 %v179, 0.0
    %v184 = vmax.f32 %v180, 0.0
    %v185 = vmax.f32 %v181, 0.0
    %186 = vst [vmem:[%s3] sm:$0xff] %v182
    %187 = vst [vmem:[%s3 + $0x8] sm:$0xff] %v183
    %188 = vst [vmem:[%s3 + $0x10] sm:$0xff] %v184
    %189 = vst [vmem:[%s3 + $0x18] sm:$0xff] %v185
  $region21: #{encoder_forward.10} parent=0 // pred_fallthru
    _
  // Predicated region
  $region22: #{encoder_forward.10} parent=0 // pred_check
    _
  $region23: #{encoder_forward.10} parent=0 // pred_check_branch
    %191 = sbr.rel (0) target = $region25
  $region24: #{encoder_forward.10} parent=0 // pred_region
    _
  $region25: #{encoder_forward.10} parent=0 // pred_fallthru
    _
  // Predicated region
  $region26: #{encoder_forward.10} parent=0 // pred_check
    _
  $region27: #{encoder_forward.10} parent=0 // pred_check_branch
    %193 = sbr.rel (0) target = $region29
  $region28: #{encoder_forward.10} parent=0 // pred_region
    _
  $region29: #{encoder_forward.10} parent=0 // pred_fallthru
    _

// kernel: encoder_forward.11
$region0: #{encoder_forward.11}
  #allocation0 [shape = 'u32[]', space=smem, size = 0x4, offset = 0x4, fixed_abs, tag = 'smem constant byte address 0x4 - core index']
  #allocation1 [shape = 'u32[144,128]{1,0:T(1,128)}', space=vmem, size = 0x12000, scoped, tag = 'internal scratch']
  #allocation2 [shape = 'f32[32,128]{1,0:T(8,128)}', space=vmem, size = 0x4000, scoped, tag = 'scratch operand']
  %s0 = inlined_call_operand.vmem [shape: bf16[32,256], index: 0, kind: input, shape index: {}]
  %s1 = inlined_call_operand.vmem [shape: bf16[256,128], index: 1, kind: input, shape index: {}]
  %s2 = inlined_call_operand.vmem [shape: f32[1,128], index: 2, kind: input, shape index: {}]
  %s3 = inlined_call_operand.vmem [shape: f32[32,128], index: 3, kind: output, shape index: {}]
  %s4 = sld [smem:[#allocation0]]
  $region30: #{encoder_forward.11} parent=0
    _
  %s6 = ssub.s32 1, %s4
  %s7 = scalar_select 0, %s6, %s4
  // Predicated region
  $region2: #{encoder_forward.11} parent=0 // pred_check
    _
  $region3: #{encoder_forward.11} parent=0 // pred_check_branch
    %9 = sbr.rel (0) target = $region5
  $region4: #{encoder_forward.11} parent=0 // pred_region
    _
  $region5: #{encoder_forward.11} parent=0 // pred_fallthru
    _
  // Predicated region
  $region6: #{encoder_forward.11} parent=0 // pred_check
    _
  $region7: #{encoder_forward.11} parent=0 // pred_check_branch
    %11 = sbr.rel (0) target = $region9
  $region8: #{encoder_forward.11} parent=0 // pred_region
    _
  $region9: #{encoder_forward.11} parent=0 // pred_fallthru
    _
  // Predicated region
  $region10: #{encoder_forward.11} parent=0 // pred_check
    _
  $region11: #{encoder_forward.11} parent=0 // pred_check_branch
    %13 = sbr.rel (0) target = $region13
  $region12: #{encoder_forward.11} parent=0 // pred_region
    _
  $region13: #{encoder_forward.11} parent=0 // pred_fallthru
    _
  %p15 = scmp.eq.s32.totalorder 0, 0
  // Predicated region
  $region14: #{encoder_forward.11} parent=0 // pred_check
    %p16 = pneg %p15
  $region15: #{encoder_forward.11} parent=0 // pred_check_branch
    %18 = sbr.rel (%p16) target = $region17
  $region16: #{encoder_forward.11} parent=0 // pred_region
    %19 = vst [vmem:[#allocation2] sm:$0xff] 0.0
    %20 = vst [vmem:[#allocation2 + $0x8] sm:$0xff] 0.0
    %21 = vst [vmem:[#allocation2 + $0x10] sm:$0xff] 0.0
    %22 = vst [vmem:[#allocation2 + $0x18] sm:$0xff] 0.0
  $region17: #{encoder_forward.11} parent=0 // pred_fallthru
    _
  %v23 = vld [vmem:[#allocation2] sm:$0xff]
  %v24 = vld [vmem:[#allocation2 + $0x8] sm:$0xff]
  %v25 = vld [vmem:[#allocation2 + $0x10] sm:$0xff]
  %v26 = vld [vmem:[#allocation2 + $0x18] sm:$0xff]
  %v27 = vld [vmem:[%s0] sm:$0xff]
  %v28 = vld [vmem:[%s0 + $0x8] sm:$0xff]
  %v29 = vld [vmem:[%s0 + $0x10] sm:$0xff]
  %v30 = vld [vmem:[%s0 + $0x18] sm:$0xff]
  %v31 = vld [vmem:[%s1] sm:$0xf]
  %v32 = vld [vmem:[%s1 + $0x4] sm:$0xf]
  %v33 = vld [vmem:[%s1 + $0x8] sm:$0xf]
  %v34 = vld [vmem:[%s1 + $0xc] sm:$0xf]
  %v35 = vld [vmem:[%s1 + $0x10] sm:$0xf]
  %v36 = vld [vmem:[%s1 + $0x14] sm:$0xf]
  %v37 = vld [vmem:[%s1 + $0x18] sm:$0xf]
  %v38 = vld [vmem:[%s1 + $0x1c] sm:$0xf]
  %v39 = vld [vmem:[%s1 + $0x20] sm:$0xf]
  %v40 = vld [vmem:[%s1 + $0x24] sm:$0xf]
  %v41 = vld [vmem:[%s1 + $0x28] sm:$0xf]
  %v42 = vld [vmem:[%s1 + $0x2c] sm:$0xf]
  %v43 = vld [vmem:[%s1 + $0x30] sm:$0xf]
  %v44 = vld [vmem:[%s1 + $0x34] sm:$0xf]
  %v45 = vld [vmem:[%s1 + $0x38] sm:$0xf]
  %v46 = vld [vmem:[%s1 + $0x3c] sm:$0xf]
  %v47 = vld [vmem:[%s1 + $0x40] sm:$0xf]
  %v48 = vld [vmem:[%s1 + $0x44] sm:$0xf]
  %v49 = vld [vmem:[%s1 + $0x48] sm:$0xf]
  %v50 = vld [vmem:[%s1 + $0x4c] sm:$0xf]
  %v51 = vld [vmem:[%s1 + $0x50] sm:$0xf]
  %v52 = vld [vmem:[%s1 + $0x54] sm:$0xf]
  %v53 = vld [vmem:[%s1 + $0x58] sm:$0xf]
  %v54 = vld [vmem:[%s1 + $0x5c] sm:$0xf]
  %v55 = vld [vmem:[%s1 + $0x60] sm:$0xf]
  %v56 = vld [vmem:[%s1 + $0x64] sm:$0xf]
  %v57 = vld [vmem:[%s1 + $0x68] sm:$0xf]
  %v58 = vld [vmem:[%s1 + $0x6c] sm:$0xf]
  %v59 = vld [vmem:[%s1 + $0x70] sm:$0xf]
  %v60 = vld [vmem:[%s1 + $0x74] sm:$0xf]
  %v61 = vld [vmem:[%s1 + $0x78] sm:$0xf]
  %v62 = vld [vmem:[%s1 + $0x7c] sm:$0xf]
  %v67 = vunpack.c.l.b16 %v27
  %v68 = vunpack.c.h.b16 %v27
  %v69 = vunpack.c.l.b16 %v28
  %v70 = vunpack.c.h.b16 %v28
  %v71 = vunpack.c.l.b16 %v29
  %v72 = vunpack.c.h.b16 %v29
  %v73 = vunpack.c.l.b16 %v30
  %v74 = vunpack.c.h.b16 %v30
  %v75 = vpack.c.b16 %v69, %v67
  %v76 = vpack.c.b16 %v70, %v68
  %v77 = vpack.c.b16 %v73, %v71
  %v78 = vpack.c.b16 %v74, %v72
  %v115 = vunpack.c.l.b16 %v31
  %v116 = vunpack.c.l.b16 %v32
  %v117 = vunpack.c.l.b16 %v33
  %v118 = vunpack.c.l.b16 %v34
  %v119 = vunpack.c.l.b16 %v35
  %v120 = vunpack.c.l.b16 %v36
  %v121 = vunpack.c.l.b16 %v37
  %v122 = vunpack.c.l.b16 %v38
  %v123 = vunpack.c.l.b16 %v39
  %v124 = vunpack.c.l.b16 %v40
  %v125 = vunpack.c.l.b16 %v41
  %v126 = vunpack.c.l.b16 %v42
  %v127 = vunpack.c.l.b16 %v43
  %v128 = vunpack.c.l.b16 %v44
  %v129 = vunpack.c.l.b16 %v45
  %v130 = vunpack.c.l.b16 %v46
  %v131 = vunpack.c.l.b16 %v47
  %v132 = vunpack.c.l.b16 %v48
  %v133 = vunpack.c.l.b16 %v49
  %v134 = vunpack.c.l.b16 %v50
  %v135 = vunpack.c.l.b16 %v51
  %v136 = vunpack.c.l.b16 %v52
  %v137 = vunpack.c.l.b16 %v53
  %v138 = vunpack.c.l.b16 %v54
  %v139 = vunpack.c.l.b16 %v55
  %v140 = vunpack.c.l.b16 %v56
  %v141 = vunpack.c.l.b16 %v57
  %v142 = vunpack.c.l.b16 %v58
  %v143 = vunpack.c.l.b16 %v59
  %v144 = vunpack.c.l.b16 %v60
  %v145 = vunpack.c.l.b16 %v61
  %v146 = vunpack.c.l.b16 %v62
  %v147 = vpack.c.b16 %v116, %v115
  %v148 = vpack.c.b16 %v118, %v117
  %v149 = vpack.c.b16 %v120, %v119
  %v150 = vpack.c.b16 %v122, %v121
  %v151 = vpack.c.b16 %v124, %v123
  %v152 = vpack.c.b16 %v126, %v125
  %v153 = vpack.c.b16 %v128, %v127
  %v154 = vpack.c.b16 %v130, %v129
  %v155 = vpack.c.b16 %v132, %v131
  %v156 = vpack.c.b16 %v134, %v133
  %v157 = vpack.c.b16 %v136, %v135
  %v158 = vpack.c.b16 %v138, %v137
  %v159 = vpack.c.b16 %v140, %v139
  %v160 = vpack.c.b16 %v142, %v141
  %v161 = vpack.c.b16 %v144, %v143
  %v162 = vpack.c.b16 %v146, %v145
  %179 = vmatprep.subr.bf16.mxu0 0
  %180 = vmatpush1.bf16.msra.mxu0 %v147
  %181 = vmatprep.subr.bf16.mxu0 0
  %182 = vmatpush1.bf16.msra.mxu0 %v148
  %183 = vmatprep.subr.bf16.mxu0 0
  %184 = vmatpush1.bf16.msra.mxu0 %v149
  %185 = vmatprep.subr.bf16.mxu0 0
  %186 = vmatpush1.bf16.msra.mxu0 %v150
  %187 = vmatprep.subr.bf16.mxu0 0
  %188 = vmatpush1.bf16.msra.mxu0 %v151
  %189 = vmatprep.subr.bf16.mxu0 0
  %190 = vmatpush1.bf16.msra.mxu0 %v152
  %191 = vmatprep.subr.bf16.mxu0 0
  %192 = vmatpush1.bf16.msra.mxu0 %v153
  %193 = vmatprep.subr.bf16.mxu0 0
  %194 = vmatpush1.bf16.msra.mxu0 %v154
  %195 = vmatprep.subr.bf16.mxu0 0
  %196 = vmatpush1.bf16.msra.mxu0 %v155
  %197 = vmatprep.subr.bf16.mxu0 0
  %198 = vmatpush1.bf16.msra.mxu0 %v156
  %199 = vmatprep.subr.bf16.mxu0 0
  %200 = vmatpush1.bf16.msra.mxu0 %v157
  %201 = vmatprep.subr.bf16.mxu0 0
  %202 = vmatpush1.bf16.msra.mxu0 %v158
  %203 = vmatprep.subr.bf16.mxu0 0
  %204 = vmatpush1.bf16.msra.mxu0 %v159
  %205 = vmatprep.subr.bf16.mxu0 0
  %206 = vmatpush1.bf16.msra.mxu0 %v160
  %207 = vmatprep.subr.bf16.mxu0 0
  %208 = vmatpush1.bf16.msra.mxu0 %v161
  %209 = vmatprep.subr.bf16.mxu0 0
  %210 = vmatpush1.bf16.msra.mxu0 %v162
  %211 = vmatprep.mubr.bf16.mxu0 %v76
  %212 = vmatmul.mubr.bf16.gmra.mrb[0].mxu0 %v75
  %v213 = vpop.f32.mrb[0].mxu0
  %v214 = vadd.f32 0.0, %v213
  %v215 = vpop.f32.mrb[0].mxu0
  %v216 = vpop.f32.mrb[0].mxu0
  %v217 = vadd.f32 0.0, %v216
  %v218 = vpop.f32.mrb[0].mxu0
  %219 = vmatprep.mubr.bf16.mxu0 %v78
  %220 = vmatmul.mubr.bf16.gmra.mrb[0].mxu0 %v77
  %v221 = vpop.f32.mrb[0].mxu0
  %v222 = vadd.f32 0.0, %v221
  %v223 = vpop.f32.mrb[0].mxu0
  %v224 = vpop.f32.mrb[0].mxu0
  %v225 = vadd.f32 0.0, %v224
  %v226 = vpop.f32.mrb[0].mxu0
  %227 = vdwg.mxu0
  %v228 = vadd.f32 %v23, %v214
  %v229 = vadd.f32 %v24, %v217
  %v230 = vadd.f32 %v25, %v222
  %v231 = vadd.f32 %v26, %v225
  %232 = vst [vmem:[#allocation2] sm:$0xff] %v228
  %233 = vst [vmem:[#allocation2 + $0x8] sm:$0xff] %v229
  %234 = vst [vmem:[#allocation2 + $0x10] sm:$0xff] %v230
  %235 = vst [vmem:[#allocation2 + $0x18] sm:$0xff] %v231
  // Predicated region
  $region18: #{encoder_forward.11} parent=0 // pred_check
    %p236 = pneg %p15
  $region19: #{encoder_forward.11} parent=0 // pred_check_branch
    %238 = sbr.rel (%p236) target = $region21
  $region20: #{encoder_forward.11} parent=0 // pred_region
    %v239 = vld [vmem:[#allocation2] sm:$0xff]
    %v240 = vld [vmem:[#allocation2 + $0x8] sm:$0xff]
    %v241 = vld [vmem:[#allocation2 + $0x10] sm:$0xff]
    %v242 = vld [vmem:[#allocation2 + $0x18] sm:$0xff]
    %v243 = vld [vmem:[%s2] sm:$0x1]
    %v245 = vlaneseq
    %v246 = vshrl.u32 %v245, 7
    %v247 = vsub.s32 0, %v246
    %v248 = vrot.slane %v243, %v247
    %v250 = vadd.f32 %v239, %v248
    %v251 = vadd.f32 %v240, %v248
    %v252 = vadd.f32 %v241, %v248
    %v253 = vadd.f32 %v242, %v248
    %v254 = vmax.f32 %v250, 0.0
    %v255 = vmax.f32 %v251, 0.0
    %v256 = vmax.f32 %v252, 0.0
    %v257 = vmax.f32 %v253, 0.0
    %258 = vst [vmem:[%s3] sm:$0xff] %v254
    %259 = vst [vmem:[%s3 + $0x8] sm:$0xff] %v255
    %260 = vst [vmem:[%s3 + $0x10] sm:$0xff] %v256
    %261 = vst [vmem:[%s3 + $0x18] sm:$0xff] %v257
  $region21: #{encoder_forward.11} parent=0 // pred_fallthru
    _
  // Predicated region
  $region22: #{encoder_forward.11} parent=0 // pred_check
    _
  $region23: #{encoder_forward.11} parent=0 // pred_check_branch
    %263 = sbr.rel (0) target = $region25
  $region24: #{encoder_forward.11} parent=0 // pred_region
    _
  $region25: #{encoder_forward.11} parent=0 // pred_fallthru
    _
  // Predicated region
  $region26: #{encoder_forward.11} parent=0 // pred_check
    _
  $region27: #{encoder_forward.11} parent=0 // pred_check_branch
    %265 = sbr.rel (0) target = $region29
  $region28: #{encoder_forward.11} parent=0 // pred_region
    _
  $region29: #{encoder_forward.11} parent=0 // pred_fallthru
    _

// kernel: encoder_forward.12
$region0: #{encoder_forward.12}
  #allocation0 [shape = 'u32[]', space=smem, size = 0x4, offset = 0x4, fixed_abs, tag = 'smem constant byte address 0x4 - core index']
  #allocation1 [shape = 'u32[144,128]{1,0:T(1,128)}', space=vmem, size = 0x12000, scoped, tag = 'internal scratch']
  #allocation2 [shape = 'f32[32,128]{1,0:T(8,128)}', space=vmem, size = 0x4000, scoped, tag = 'scratch operand']
  %s0 = inlined_call_operand.vmem [shape: bf16[32,256], index: 0, kind: input, shape index: {}]
  %s1 = inlined_call_operand.vmem [shape: bf16[256,128], index: 1, kind: input, shape index: {}]
  %s2 = inlined_call_operand.vmem [shape: f32[1,128], index: 2, kind: input, shape index: {}]
  %s3 = inlined_call_operand.vmem [shape: f32[32,128], index: 3, kind: input, shape index: {}]
  %s4 = inlined_call_operand.vmem [shape: f32[32,128], index: 4, kind: output, shape index: {}]
  %s5 = sld [smem:[#allocation0]]
  $region34: #{encoder_forward.12} parent=0
    _
  %s7 = ssub.s32 1, %s5
  %s8 = scalar_select 0, %s7, %s5
  // Predicated region
  $region2: #{encoder_forward.12} parent=0 // pred_check
    _
  $region3: #{encoder_forward.12} parent=0 // pred_check_branch
    %10 = sbr.rel (0) target = $region5
  $region4: #{encoder_forward.12} parent=0 // pred_region
    _
  $region5: #{encoder_forward.12} parent=0 // pred_fallthru
    _
  // Predicated region
  $region6: #{encoder_forward.12} parent=0 // pred_check
    _
  $region7: #{encoder_forward.12} parent=0 // pred_check_branch
    %12 = sbr.rel (0) target = $region9
  $region8: #{encoder_forward.12} parent=0 // pred_region
    _
  $region9: #{encoder_forward.12} parent=0 // pred_fallthru
    _
  // Predicated region
  $region10: #{encoder_forward.12} parent=0 // pred_check
    _
  $region11: #{encoder_forward.12} parent=0 // pred_check_branch
    %14 = sbr.rel (0) target = $region13
  $region12: #{encoder_forward.12} parent=0 // pred_region
    _
  $region13: #{encoder_forward.12} parent=0 // pred_fallthru
    _
  // Predicated region
  $region14: #{encoder_forward.12} parent=0 // pred_check
    _
  $region15: #{encoder_forward.12} parent=0 // pred_check_branch
    %16 = sbr.rel (0) target = $region17
  $region16: #{encoder_forward.12} parent=0 // pred_region
    _
  $region17: #{encoder_forward.12} parent=0 // pred_fallthru
    _
  %p18 = scmp.eq.s32.totalorder 0, 0
  // Predicated region
  $region18: #{encoder_forward.12} parent=0 // pred_check
    %p19 = pneg %p18
  $region19: #{encoder_forward.12} parent=0 // pred_check_branch
    %21 = sbr.rel (%p19) target = $region21
  $region20: #{encoder_forward.12} parent=0 // pred_region
    %22 = vst [vmem:[#allocation2] sm:$0xff] 0.0
    %23 = vst [vmem:[#allocation2 + $0x8] sm:$0xff] 0.0
    %24 = vst [vmem:[#allocation2 + $0x10] sm:$0xff] 0.0
    %25 = vst [vmem:[#allocation2 + $0x18] sm:$0xff] 0.0
  $region21: #{encoder_forward.12} parent=0 // pred_fallthru
    _
  %v26 = vld [vmem:[#allocation2] sm:$0xff]
  %v27 = vld [vmem:[#allocation2 + $0x8] sm:$0xff]
  %v28 = vld [vmem:[#allocation2 + $0x10] sm:$0xff]
  %v29 = vld [vmem:[#allocation2 + $0x18] sm:$0xff]
  %v30 = vld [vmem:[%s0] sm:$0xff]
  %v31 = vld [vmem:[%s0 + $0x8] sm:$0xff]
  %v32 = vld [vmem:[%s0 + $0x10] sm:$0xff]
  %v33 = vld [vmem:[%s0 + $0x18] sm:$0xff]
  %v34 = vld [vmem:[%s1] sm:$0xf]
  %v35 = vld [vmem:[%s1 + $0x4] sm:$0xf]
  %v36 = vld [vmem:[%s1 + $0x8] sm:$0xf]
  %v37 = vld [vmem:[%s1 + $0xc] sm:$0xf]
  %v38 = vld [vmem:[%s1 + $0x10] sm:$0xf]
  %v39 = vld [vmem:[%s1 + $0x14] sm:$0xf]
  %v40 = vld [vmem:[%s1 + $0x18] sm:$0xf]
  %v41 = vld [vmem:[%s1 + $0x1c] sm:$0xf]
  %v42 = vld [vmem:[%s1 + $0x20] sm:$0xf]
  %v43 = vld [vmem:[%s1 + $0x24] sm:$0xf]
  %v44 = vld [vmem:[%s1 + $0x28] sm:$0xf]
  %v45 = vld [vmem:[%s1 + $0x2c] sm:$0xf]
  %v46 = vld [vmem:[%s1 + $0x30] sm:$0xf]
  %v47 = vld [vmem:[%s1 + $0x34] sm:$0xf]
  %v48 = vld [vmem:[%s1 + $0x38] sm:$0xf]
  %v49 = vld [vmem:[%s1 + $0x3c] sm:$0xf]
  %v50 = vld [vmem:[%s1 + $0x40] sm:$0xf]
  %v51 = vld [vmem:[%s1 + $0x44] sm:$0xf]
  %v52 = vld [vmem:[%s1 + $0x48] sm:$0xf]
  %v53 = vld [vmem:[%s1 + $0x4c] sm:$0xf]
  %v54 = vld [vmem:[%s1 + $0x50] sm:$0xf]
  %v55 = vld [vmem:[%s1 + $0x54] sm:$0xf]
  %v56 = vld [vmem:[%s1 + $0x58] sm:$0xf]
  %v57 = vld [vmem:[%s1 + $0x5c] sm:$0xf]
  %v58 = vld [vmem:[%s1 + $0x60] sm:$0xf]
  %v59 = vld [vmem:[%s1 + $0x64] sm:$0xf]
  %v60 = vld [vmem:[%s1 + $0x68] sm:$0xf]
  %v61 = vld [vmem:[%s1 + $0x6c] sm:$0xf]
  %v62 = vld [vmem:[%s1 + $0x70] sm:$0xf]
  %v63 = vld [vmem:[%s1 + $0x74] sm:$0xf]
  %v64 = vld [vmem:[%s1 + $0x78] sm:$0xf]
  %v65 = vld [vmem:[%s1 + $0x7c] sm:$0xf]
  %v70 = vunpack.c.l.b16 %v30
  %v71 = vunpack.c.h.b16 %v30
  %v72 = vunpack.c.l.b16 %v31
  %v73 = vunpack.c.h.b16 %v31
  %v74 = vunpack.c.l.b16 %v32
  %v75 = vunpack.c.h.b16 %v32
  %v76 = vunpack.c.l.b16 %v33
  %v77 = vunpack.c.h.b16 %v33
  %v78 = vpack.c.b16 %v72, %v70
  %v79 = vpack.c.b16 %v73, %v71
  %v80 = vpack.c.b16 %v76, %v74
  %v81 = vpack.c.b16 %v77, %v75
  %v118 = vunpack.c.l.b16 %v34
  %v119 = vunpack.c.l.b16 %v35
  %v120 = vunpack.c.l.b16 %v36
  %v121 = vunpack.c.l.b16 %v37
  %v122 = vunpack.c.l.b16 %v38
  %v123 = vunpack.c.l.b16 %v39
  %v124 = vunpack.c.l.b16 %v40
  %v125 = vunpack.c.l.b16 %v41
  %v126 = vunpack.c.l.b16 %v42
  %v127 = vunpack.c.l.b16 %v43
  %v128 = vunpack.c.l.b16 %v44
  %v129 = vunpack.c.l.b16 %v45
  %v130 = vunpack.c.l.b16 %v46
  %v131 = vunpack.c.l.b16 %v47
  %v132 = vunpack.c.l.b16 %v48
  %v133 = vunpack.c.l.b16 %v49
  %v134 = vunpack.c.l.b16 %v50
  %v135 = vunpack.c.l.b16 %v51
  %v136 = vunpack.c.l.b16 %v52
  %v137 = vunpack.c.l.b16 %v53
  %v138 = vunpack.c.l.b16 %v54
  %v139 = vunpack.c.l.b16 %v55
  %v140 = vunpack.c.l.b16 %v56
  %v141 = vunpack.c.l.b16 %v57
  %v142 = vunpack.c.l.b16 %v58
  %v143 = vunpack.c.l.b16 %v59
  %v144 = vunpack.c.l.b16 %v60
  %v145 = vunpack.c.l.b16 %v61
  %v146 = vunpack.c.l.b16 %v62
  %v147 = vunpack.c.l.b16 %v63
  %v148 = vunpack.c.l.b16 %v64
  %v149 = vunpack.c.l.b16 %v65
  %v150 = vpack.c.b16 %v119, %v118
  %v151 = vpack.c.b16 %v121, %v120
  %v152 = vpack.c.b16 %v123, %v122
  %v153 = vpack.c.b16 %v125, %v124
  %v154 = vpack.c.b16 %v127, %v126
  %v155 = vpack.c.b16 %v129, %v128
  %v156 = vpack.c.b16 %v131, %v130
  %v157 = vpack.c.b16 %v133, %v132
  %v158 = vpack.c.b16 %v135, %v134
  %v159 = vpack.c.b16 %v137, %v136
  %v160 = vpack.c.b16 %v139, %v138
  %v161 = vpack.c.b16 %v141, %v140
  %v162 = vpack.c.b16 %v143, %v142
  %v163 = vpack.c.b16 %v145, %v144
  %v164 = vpack.c.b16 %v147, %v146
  %v165 = vpack.c.b16 %v149, %v148
  %182 = vmatprep.subr.bf16.mxu0 0
  %183 = vmatpush1.bf16.msra.mxu0 %v150
  %184 = vmatprep.subr.bf16.mxu0 0
  %185 = vmatpush1.bf16.msra.mxu0 %v151
  %186 = vmatprep.subr.bf16.mxu0 0
  %187 = vmatpush1.bf16.msra.mxu0 %v152
  %188 = vmatprep.subr.bf16.mxu0 0
  %189 = vmatpush1.bf16.msra.mxu0 %v153
  %190 = vmatprep.subr.bf16.mxu0 0
  %191 = vmatpush1.bf16.msra.mxu0 %v154
  %192 = vmatprep.subr.bf16.mxu0 0
  %193 = vmatpush1.bf16.msra.mxu0 %v155
  %194 = vmatprep.subr.bf16.mxu0 0
  %195 = vmatpush1.bf16.msra.mxu0 %v156
  %196 = vmatprep.subr.bf16.mxu0 0
  %197 = vmatpush1.bf16.msra.mxu0 %v157
  %198 = vmatprep.subr.bf16.mxu0 0
  %199 = vmatpush1.bf16.msra.mxu0 %v158
  %200 = vmatprep.subr.bf16.mxu0 0
  %201 = vmatpush1.bf16.msra.mxu0 %v159
  %202 = vmatprep.subr.bf16.mxu0 0
  %203 = vmatpush1.bf16.msra.mxu0 %v160
  %204 = vmatprep.subr.bf16.mxu0 0
  %205 = vmatpush1.bf16.msra.mxu0 %v161
  %206 = vmatprep.subr.bf16.mxu0 0
  %207 = vmatpush1.bf16.msra.mxu0 %v162
  %208 = vmatprep.subr.bf16.mxu0 0
  %209 = vmatpush1.bf16.msra.mxu0 %v163
  %210 = vmatprep.subr.bf16.mxu0 0
  %211 = vmatpush1.bf16.msra.mxu0 %v164
  %212 = vmatprep.subr.bf16.mxu0 0
  %213 = vmatpush1.bf16.msra.mxu0 %v165
  %214 = vmatprep.mubr.bf16.mxu0 %v79
  %215 = vmatmul.mubr.bf16.gmra.mrb[0].mxu0 %v78
  %v216 = vpop.f32.mrb[0].mxu0
  %v217 = vadd.f32 0.0, %v216
  %v218 = vpop.f32.mrb[0].mxu0
  %v219 = vpop.f32.mrb[0].mxu0
  %v220 = vadd.f32 0.0, %v219
  %v221 = vpop.f32.mrb[0].mxu0
  %222 = vmatprep.mubr.bf16.mxu0 %v81
  %223 = vmatmul.mubr.bf16.gmra.mrb[0].mxu0 %v80
  %v224 = vpop.f32.mrb[0].mxu0
  %v225 = vadd.f32 0.0, %v224
  %v226 = vpop.f32.mrb[0].mxu0
  %v227 = vpop.f32.mrb[0].mxu0
  %v228 = vadd.f32 0.0, %v227
  %v229 = vpop.f32.mrb[0].mxu0
  %230 = vdwg.mxu0
  %v231 = vadd.f32 %v26, %v217
  %v232 = vadd.f32 %v27, %v220
  %v233 = vadd.f32 %v28, %v225
  %v234 = vadd.f32 %v29, %v228
  %235 = vst [vmem:[#allocation2] sm:$0xff] %v231
  %236 = vst [vmem:[#allocation2 + $0x8] sm:$0xff] %v232
  %237 = vst [vmem:[#allocation2 + $0x10] sm:$0xff] %v233
  %238 = vst [vmem:[#allocation2 + $0x18] sm:$0xff] %v234
  // Predicated region
  $region22: #{encoder_forward.12} parent=0 // pred_check
    %p239 = pneg %p18
  $region23: #{encoder_forward.12} parent=0 // pred_check_branch
    %241 = sbr.rel (%p239) target = $region25
  $region24: #{encoder_forward.12} parent=0 // pred_region
    %v242 = vld [vmem:[#allocation2] sm:$0xff]
    %v243 = vld [vmem:[#allocation2 + $0x8] sm:$0xff]
    %v244 = vld [vmem:[#allocation2 + $0x10] sm:$0xff]
    %v245 = vld [vmem:[#allocation2 + $0x18] sm:$0xff]
    %v246 = vld [vmem:[%s2] sm:$0x1]
    %v248 = vlaneseq
    %v249 = vshrl.u32 %v248, 7
    %v250 = vsub.s32 0, %v249
    %v251 = vrot.slane %v246, %v250
    %v253 = vadd.f32 %v242, %v251
    %v254 = vadd.f32 %v243, %v251
    %v255 = vadd.f32 %v244, %v251
    %v256 = vadd.f32 %v245, %v251
    %v257 = vld [vmem:[%s3] sm:$0xff]
    %v258 = vld [vmem:[%s3 + $0x8] sm:$0xff]
    %v259 = vld [vmem:[%s3 + $0x10] sm:$0xff]
    %v260 = vld [vmem:[%s3 + $0x18] sm:$0xff]
    %v261 = vadd.f32 %v253, %v257
    %v262 = vadd.f32 %v254, %v258
    %v263 = vadd.f32 %v255, %v259
    %v264 = vadd.f32 %v256, %v260
    %v265 = vmax.f32 %v261, 0.0
    %v266 = vmax.f32 %v262, 0.0
    %v267 = vmax.f32 %v263, 0.0
    %v268 = vmax.f32 %v264, 0.0
    %269 = vst [vmem:[%s4] sm:$0xff] %v265
    %270 = vst [vmem:[%s4 + $0x8] sm:$0xff] %v266
    %271 = vst [vmem:[%s4 + $0x10] sm:$0xff] %v267
    %272 = vst [vmem:[%s4 + $0x18] sm:$0xff] %v268
  $region25: #{encoder_forward.12} parent=0 // pred_fallthru
    _
  // Predicated region
  $region26: #{encoder_forward.12} parent=0 // pred_check
    _
  $region27: #{encoder_forward.12} parent=0 // pred_check_branch
    %274 = sbr.rel (0) target = $region29
  $region28: #{encoder_forward.12} parent=0 // pred_region
    _
  $region29: #{encoder_forward.12} parent=0 // pred_fallthru
    _
  // Predicated region
  $region30: #{encoder_forward.12} parent=0 // pred_check
    _
  $region31: #{encoder_forward.12} parent=0 // pred_check_branch
    %276 = sbr.rel (0) target = $region33
  $region32: #{encoder_forward.12} parent=0 // pred_region
    _
  $region33: #{encoder_forward.12} parent=0 // pred_fallthru
    _

// kernel: encoder_forward.13
$region0: #{encoder_forward.13}
  #allocation0 [shape = 'u32[]', space=smem, size = 0x4, offset = 0x4, fixed_abs, tag = 'smem constant byte address 0x4 - core index']
  #allocation1 [shape = 'u32[144,128]{1,0:T(1,128)}', space=vmem, size = 0x12000, scoped, tag = 'internal scratch']
  #allocation2 [shape = 'f32[32,128]{1,0:T(8,128)}', space=vmem, size = 0x4000, scoped, tag = 'scratch operand']
  %s0 = inlined_call_operand.vmem [shape: bf16[32,128], index: 0, kind: input, shape index: {}]
  %s1 = inlined_call_operand.vmem [shape: bf16[128,128], index: 1, kind: input, shape index: {}]
  %s2 = inlined_call_operand.vmem [shape: f32[1,128], index: 2, kind: input, shape index: {}]
  %s3 = inlined_call_operand.vmem [shape: f32[32,128], index: 3, kind: output, shape index: {}]
  %s4 = sld [smem:[#allocation0]]
  $region30: #{encoder_forward.13} parent=0
    _
  %s6 = ssub.s32 1, %s4
  %s7 = scalar_select 0, %s6, %s4
  // Predicated region
  $region2: #{encoder_forward.13} parent=0 // pred_check
    _
  $region3: #{encoder_forward.13} parent=0 // pred_check_branch
    %9 = sbr.rel (0) target = $region5
  $region4: #{encoder_forward.13} parent=0 // pred_region
    _
  $region5: #{encoder_forward.13} parent=0 // pred_fallthru
    _
  // Predicated region
  $region6: #{encoder_forward.13} parent=0 // pred_check
    _
  $region7: #{encoder_forward.13} parent=0 // pred_check_branch
    %11 = sbr.rel (0) target = $region9
  $region8: #{encoder_forward.13} parent=0 // pred_region
    _
  $region9: #{encoder_forward.13} parent=0 // pred_fallthru
    _
  // Predicated region
  $region10: #{encoder_forward.13} parent=0 // pred_check
    _
  $region11: #{encoder_forward.13} parent=0 // pred_check_branch
    %13 = sbr.rel (0) target = $region13
  $region12: #{encoder_forward.13} parent=0 // pred_region
    _
  $region13: #{encoder_forward.13} parent=0 // pred_fallthru
    _
  %p15 = scmp.eq.s32.totalorder 0, 0
  // Predicated region
  $region14: #{encoder_forward.13} parent=0 // pred_check
    %p16 = pneg %p15
  $region15: #{encoder_forward.13} parent=0 // pred_check_branch
    %18 = sbr.rel (%p16) target = $region17
  $region16: #{encoder_forward.13} parent=0 // pred_region
    %19 = vst [vmem:[#allocation2] sm:$0xff] 0.0
    %20 = vst [vmem:[#allocation2 + $0x8] sm:$0xff] 0.0
    %21 = vst [vmem:[#allocation2 + $0x10] sm:$0xff] 0.0
    %22 = vst [vmem:[#allocation2 + $0x18] sm:$0xff] 0.0
  $region17: #{encoder_forward.13} parent=0 // pred_fallthru
    _
  %v23 = vld [vmem:[#allocation2] sm:$0xff]
  %v24 = vld [vmem:[#allocation2 + $0x8] sm:$0xff]
  %v25 = vld [vmem:[#allocation2 + $0x10] sm:$0xff]
  %v26 = vld [vmem:[#allocation2 + $0x18] sm:$0xff]
  %v27 = vld [vmem:[%s0] sm:$0xf]
  %v28 = vld [vmem:[%s0 + $0x4] sm:$0xf]
  %v29 = vld [vmem:[%s0 + $0x8] sm:$0xf]
  %v30 = vld [vmem:[%s0 + $0xc] sm:$0xf]
  %v31 = vld [vmem:[%s1] sm:$0xf]
  %v32 = vld [vmem:[%s1 + $0x4] sm:$0xf]
  %v33 = vld [vmem:[%s1 + $0x8] sm:$0xf]
  %v34 = vld [vmem:[%s1 + $0xc] sm:$0xf]
  %v35 = vld [vmem:[%s1 + $0x10] sm:$0xf]
  %v36 = vld [vmem:[%s1 + $0x14] sm:$0xf]
  %v37 = vld [vmem:[%s1 + $0x18] sm:$0xf]
  %v38 = vld [vmem:[%s1 + $0x1c] sm:$0xf]
  %v39 = vld [vmem:[%s1 + $0x20] sm:$0xf]
  %v40 = vld [vmem:[%s1 + $0x24] sm:$0xf]
  %v41 = vld [vmem:[%s1 + $0x28] sm:$0xf]
  %v42 = vld [vmem:[%s1 + $0x2c] sm:$0xf]
  %v43 = vld [vmem:[%s1 + $0x30] sm:$0xf]
  %v44 = vld [vmem:[%s1 + $0x34] sm:$0xf]
  %v45 = vld [vmem:[%s1 + $0x38] sm:$0xf]
  %v46 = vld [vmem:[%s1 + $0x3c] sm:$0xf]
  %v51 = vunpack.c.l.b16 %v27
  %v52 = vunpack.c.l.b16 %v28
  %v53 = vunpack.c.l.b16 %v29
  %v54 = vunpack.c.l.b16 %v30
  %v55 = vpack.c.b16 %v52, %v51
  %v56 = vpack.c.b16 %v54, %v53
  %v75 = vunpack.c.l.b16 %v31
  %v76 = vunpack.c.l.b16 %v32
  %v77 = vunpack.c.l.b16 %v33
  %v78 = vunpack.c.l.b16 %v34
  %v79 = vunpack.c.l.b16 %v35
  %v80 = vunpack.c.l.b16 %v36
  %v81 = vunpack.c.l.b16 %v37
  %v82 = vunpack.c.l.b16 %v38
  %v83 = vunpack.c.l.b16 %v39
  %v84 = vunpack.c.l.b16 %v40
  %v85 = vunpack.c.l.b16 %v41
  %v86 = vunpack.c.l.b16 %v42
  %v87 = vunpack.c.l.b16 %v43
  %v88 = vunpack.c.l.b16 %v44
  %v89 = vunpack.c.l.b16 %v45
  %v90 = vunpack.c.l.b16 %v46
  %v91 = vpack.c.b16 %v76, %v75
  %v92 = vpack.c.b16 %v78, %v77
  %v93 = vpack.c.b16 %v80, %v79
  %v94 = vpack.c.b16 %v82, %v81
  %v95 = vpack.c.b16 %v84, %v83
  %v96 = vpack.c.b16 %v86, %v85
  %v97 = vpack.c.b16 %v88, %v87
  %v98 = vpack.c.b16 %v90, %v89
  %107 = vmatprep.subr.bf16.mxu0 0
  %108 = vmatpush1.bf16.msra.mxu0 %v91
  %109 = vmatprep.subr.bf16.mxu0 0
  %110 = vmatpush1.bf16.msra.mxu0 %v92
  %111 = vmatprep.subr.bf16.mxu0 0
  %112 = vmatpush1.bf16.msra.mxu0 %v93
  %113 = vmatprep.subr.bf16.mxu0 0
  %114 = vmatpush1.bf16.msra.mxu0 %v94
  %115 = vmatprep.subr.bf16.mxu0 0
  %116 = vmatpush1.bf16.msra.mxu0 %v95
  %117 = vmatprep.subr.bf16.mxu0 0
  %118 = vmatpush1.bf16.msra.mxu0 %v96
  %119 = vmatprep.subr.bf16.mxu0 0
  %120 = vmatpush1.bf16.msra.mxu0 %v97
  %121 = vmatprep.subr.bf16.mxu0 0
  %122 = vmatpush1.bf16.msra.mxu0 %v98
  %123 = vmatprep.subr.bf16.mxu0 0
  %124 = vmatpush1.bf16.msra.mxu0 0
  %125 = vmatprep.subr.bf16.mxu0 0
  %126 = vmatpush1.bf16.msra.mxu0 0
  %127 = vmatprep.subr.bf16.mxu0 0
  %128 = vmatpush1.bf16.msra.mxu0 0
  %129 = vmatprep.subr.bf16.mxu0 0
  %130 = vmatpush1.bf16.msra.mxu0 0
  %131 = vmatprep.subr.bf16.mxu0 0
  %132 = vmatpush1.bf16.msra.mxu0 0
  %133 = vmatprep.subr.bf16.mxu0 0
  %134 = vmatpush1.bf16.msra.mxu0 0
  %135 = vmatprep.subr.bf16.mxu0 0
  %136 = vmatpush1.bf16.msra.mxu0 0
  %137 = vmatprep.subr.bf16.mxu0 0
  %138 = vmatpush1.bf16.msra.mxu0 0
  %139 = vmatprep.mubr.bf16.mxu0 0
  %140 = vmatmul.mubr.bf16.gmra.mrb[0].mxu0 %v55
  %v141 = vpop.f32.mrb[0].mxu0
  %v142 = vadd.f32 0.0, %v141
  %v143 = vpop.f32.mrb[0].mxu0
  %v144 = vpop.f32.mrb[0].mxu0
  %v145 = vadd.f32 0.0, %v144
  %v146 = vpop.f32.mrb[0].mxu0
  %147 = vmatprep.mubr.bf16.mxu0 0
  %148 = vmatmul.mubr.bf16.gmra.mrb[0].mxu0 %v56
  %v149 = vpop.f32.mrb[0].mxu0
  %v150 = vadd.f32 0.0, %v149
  %v151 = vpop.f32.mrb[0].mxu0
  %v152 = vpop.f32.mrb[0].mxu0
  %v153 = vadd.f32 0.0, %v152
  %v154 = vpop.f32.mrb[0].mxu0
  %155 = vdwg.mxu0
  %v156 = vadd.f32 %v23, %v142
  %v157 = vadd.f32 %v24, %v145
  %v158 = vadd.f32 %v25, %v150
  %v159 = vadd.f32 %v26, %v153
  %160 = vst [vmem:[#allocation2] sm:$0xff] %v156
  %161 = vst [vmem:[#allocation2 + $0x8] sm:$0xff] %v157
  %162 = vst [vmem:[#allocation2 + $0x10] sm:$0xff] %v158
  %163 = vst [vmem:[#allocation2 + $0x18] sm:$0xff] %v159
  // Predicated region
  $region18: #{encoder_forward.13} parent=0 // pred_check
    %p164 = pneg %p15
  $region19: #{encoder_forward.13} parent=0 // pred_check_branch
    %166 = sbr.rel (%p164) target = $region21
  $region20: #{encoder_forward.13} parent=0 // pred_region
    %v167 = vld [vmem:[#allocation2] sm:$0xff]
    %v168 = vld [vmem:[#allocation2 + $0x8] sm:$0xff]
    %v169 = vld [vmem:[#allocation2 + $0x10] sm:$0xff]
    %v170 = vld [vmem:[#allocation2 + $0x18] sm:$0xff]
    %v171 = vld [vmem:[%s2] sm:$0x1]
    %v173 = vlaneseq
    %v174 = vshrl.u32 %v173, 7
    %v175 = vsub.s32 0, %v174
    %v176 = vrot.slane %v171, %v175
    %v178 = vadd.f32 %v167, %v176
    %v179 = vadd.f32 %v168, %v176
    %v180 = vadd.f32 %v169, %v176
    %v181 = vadd.f32 %v170, %v176
    %182 = vst [vmem:[%s3] sm:$0xff] %v178
    %183 = vst [vmem:[%s3 + $0x8] sm:$0xff] %v179
    %184 = vst [vmem:[%s3 + $0x10] sm:$0xff] %v180
    %185 = vst [vmem:[%s3 + $0x18] sm:$0xff] %v181
  $region21: #{encoder_forward.13} parent=0 // pred_fallthru
    _
  // Predicated region
  $region22: #{encoder_forward.13} parent=0 // pred_check
    _
  $region23: #{encoder_forward.13} parent=0 // pred_check_branch
    %187 = sbr.rel (0) target = $region25
  $region24: #{encoder_forward.13} parent=0 // pred_region
    _
  $region25: #{encoder_forward.13} parent=0 // pred_fallthru
    _
  // Predicated region
  $region26: #{encoder_forward.13} parent=0 // pred_check
    _
  $region27: #{encoder_forward.13} parent=0 // pred_check_branch
    %189 = sbr.rel (0) target = $region29
  $region28: #{encoder_forward.13} parent=0 // pred_region
    _
  $region29: #{encoder_forward.13} parent=0 // pred_fallthru
    _

// kernel: encoder_forward.14
$region0: #{encoder_forward.14}
  #allocation0 [shape = 'u32[]', space=smem, size = 0x4, offset = 0x4, fixed_abs, tag = 'smem constant byte address 0x4 - core index']
  #allocation1 [shape = 'u32[144,128]{1,0:T(1,128)}', space=vmem, size = 0x12000, scoped, tag = 'internal scratch']
  %s0 = inlined_call_operand.vmem [shape: f32[16,2,128], index: 0, kind: input, shape index: {}]
  %s1 = inlined_call_operand.vmem [shape: bf16[2,16,64], index: 1, kind: input, shape index: {}]
  %s2 = inlined_call_operand.vmem [shape: f32[2,16,2,16], index: 2, kind: output, shape index: {}]
  %s3 = sld [smem:[#allocation0]]
  $region48: #{encoder_forward.14} parent=0
    _
  %s5 = ssub.s32 1, %s3
  %s6 = scalar_select 0, %s5, %s3
  loop: start=0, step=1, limit=4
  $region2: #{encoder_forward.14} parent=0 // loop_pre_header
    _
  $region3: #{encoder_forward.14} parent=0 // loop_header
    %s8 = sphi 0, %s12
    %p9 = scmp.ge.s32.totalorder %s8, 4
    %s16 = sphi 0, %s16
    %s18 = sphi 0, %s16
    %s19 = sphi 0, %s18
    %s33 = sphi 0, %s19
    %s39 = sphi 0, %s41
    %s42 = sphi 0, %s39
    %s43 = sphi 0, %s42
    %s59 = sphi 0, %s43
    %s65 = sphi 0, %s67
    %s68 = sphi 0, %s65
    %s69 = sphi 0, %s68
    %s85 = sphi 0, %s69
  $region4: #{encoder_forward.14} parent=0 // loop_header_branch
    %11 = sbr.rel (%p9) target = $region8
  $region5: #{encoder_forward.14} parent=0 // loop_body
    %s13 = ssub.s32 %s8, 1
    %s14 = ssub.s32 %s8, 2
    %s15 = sadd.s32 %s8, 1
    %s17 = sadd.s32 %s16, 1
    %p20 = scmp.eq.s32.totalorder %s8, 1
    %p21 = scmp.ne.s32.totalorder %s16, %s18
    %p22 = scmp.eq.s32.totalorder %s8, 0
    %p23 = por %p21, %p22
    %p24 = scmp.ne.s32.totalorder %s16, %s18
    %p25 = scmp.eq.s32.totalorder %s13, 1
    %p26 = por %p24, %p25
    %p27 = scmp.ne.s32.totalorder %s18, %s19
    %p28 = scmp.eq.s32.totalorder %s13, 0
    %p29 = por %p27, %p28
    %p30 = scmp.ne.s32.totalorder %s18, %s19
    %p31 = scmp.eq.s32.totalorder %s14, 1
    %p32 = por %p30, %p31
    %p34 = scmp.ne.s32.totalorder %s19, %s33
    %p35 = scmp.eq.s32.totalorder %s14, 0
    %p36 = por %p34, %p35
    %s37 = ssub.s32 %s8, %s15
    %p38 = scmp.eq.s32.totalorder %s37, 0
    %s40 = sadd.s32 %s39, 1
    %s41 = scalar_select %p38, %s39, %s40
    %p44 = pneg %p38
    %p45 = scmp.eq.s32.totalorder %s8, 1
    %p46 = por %p44, %p45
    %p47 = scmp.ne.s32.totalorder %s39, %s42
    %p48 = scmp.eq.s32.totalorder %s8, 0
    %p49 = por %p47, %p48
    %p50 = scmp.ne.s32.totalorder %s39, %s42
    %p51 = scmp.eq.s32.totalorder %s13, 1
    %p52 = por %p50, %p51
    %p53 = scmp.ne.s32.totalorder %s42, %s43
    %p54 = scmp.eq.s32.totalorder %s13, 0
    %p55 = por %p53, %p54
    %p56 = scmp.ne.s32.totalorder %s42, %s43
    %p57 = scmp.eq.s32.totalorder %s14, 1
    %p58 = por %p56, %p57
    %p60 = scmp.ne.s32.totalorder %s43, %s59
    %p61 = scmp.eq.s32.totalorder %s14, 0
    %p62 = por %p60, %p61
    %s63 = ssub.s32 %s8, %s15
    %p64 = scmp.eq.s32.totalorder %s63, 0
    %s66 = sadd.s32 %s65, 1
    %s67 = scalar_select %p64, %s65, %s66
    %p70 = pneg %p64
    %p71 = scmp.eq.s32.totalorder %s8, 1
    %p72 = por %p70, %p71
    %p73 = scmp.ne.s32.totalorder %s65, %s68
    %p74 = scmp.eq.s32.totalorder %s8, 0
    %p75 = por %p73, %p74
    %p76 = scmp.ne.s32.totalorder %s65, %s68
    %p77 = scmp.eq.s32.totalorder %s13, 1
    %p78 = por %p76, %p77
    %p79 = scmp.ne.s32.totalorder %s68, %s69
    %p80 = scmp.eq.s32.totalorder %s13, 0
    %p81 = por %p79, %p80
    %p82 = scmp.ne.s32.totalorder %s68, %s69
    %p83 = scmp.eq.s32.totalorder %s14, 1
    %p84 = por %p82, %p83
    %p86 = scmp.ne.s32.totalorder %s69, %s85
    %p87 = scmp.eq.s32.totalorder %s14, 0
    %p88 = por %p86, %p87
    %p89 = scmp.le.s32.totalorder 1, %s8
    %p90 = scmp.lt.s32.totalorder %s8, 3
    %p91 = pnand %p89, %p90
    %p92 = pneg %p91
    // Predicated region
    $region9: #{encoder_forward.14} parent=5 // pred_check
      _
    $region10: #{encoder_forward.14} parent=5 // pred_check_branch
      %94 = sbr.rel (%p91) target = $region12
    $region11: #{encoder_forward.14} parent=5 // pred_region
      %s95 = ssub.s32 %s8, 1
      // Predicated region
      $region13: #{encoder_forward.14} parent=11 // pred_check
        %p96 = pneg %p29
      $region14: #{encoder_forward.14} parent=11 // pred_check_branch
        %98 = sbr.rel (%p96) target = $region16
      $region15: #{encoder_forward.14} parent=11 // pred_region
        _
      $region16: #{encoder_forward.14} parent=11 // pred_fallthru
        _
    $region12: #{encoder_forward.14} parent=5 // pred_fallthru
      _
    %p99 = scmp.lt.s32.totalorder %s8, 2
    // Predicated region
    $region17: #{encoder_forward.14} parent=5 // pred_check
      %p100 = pneg %p99
    $region18: #{encoder_forward.14} parent=5 // pred_check_branch
      %102 = sbr.rel (%p100) target = $region20
    $region19: #{encoder_forward.14} parent=5 // pred_region
      // Predicated region
      $region21: #{encoder_forward.14} parent=19 // pred_check
        %p103 = pneg %p49
      $region22: #{encoder_forward.14} parent=19 // pred_check_branch
        %105 = sbr.rel (%p103) target = $region24
      $region23: #{encoder_forward.14} parent=19 // pred_region
        %p106 = scmp.lt.s32.totalorder %s8, 1
        %s107 = scalar_select %p106, %s8, 1
        %s108 = smul.addr %s107, 2
        %s109 = smul.addr %s108, 4
        %s110 = scalar_lea.vmem %s1, %s109
      $region24: #{encoder_forward.14} parent=19 // pred_fallthru
        _
    $region20: #{encoder_forward.14} parent=5 // pred_fallthru
      _
    %p111 = scmp.le.s32.totalorder 1, %s8
    %p112 = scmp.lt.s32.totalorder %s8, 3
    %p113 = pnand %p111, %p112
    %p114 = pneg %p113
    // Predicated region
    $region25: #{encoder_forward.14} parent=5 // pred_check
      _
    $region26: #{encoder_forward.14} parent=5 // pred_check_branch
      %116 = sbr.rel (%p113) target = $region28
    $region27: #{encoder_forward.14} parent=5 // pred_region
      %s117 = ssub.s32 %s8, 1
      %p118 = pneg %p29
      %p119 = pneg %p26
      %p120 = scmp.lt.s32.totalorder %s13, 1
      %s121 = scalar_select %p120, %s13, 1
      %s122 = smul.addr %s121, 2
      %s123 = smul.addr %s122, 4
      %s124 = scalar_lea.vmem %s1, %s123
      %p125 = pneg %p55
      %p126 = pneg %p52
      %p127 = pneg %p81
      %p128 = pneg %p78
      %p129 = scmp.lt.s32.totalorder %s13, 1
      %s130 = scalar_select %p129, %s13, 1
      %s131 = smul.addr %s130, 16
      %s132 = smul.addr %s131, 2
      %s133 = scalar_lea.vmem %s2, %s132
      %p134 = scmp.lt.s32.totalorder %s13, 1
      %s135 = scalar_select %p134, %s13, 1
      %s136 = smul.addr %s135, 2
      %s137 = smul.addr %s136, 4
      %s138 = scalar_lea.vmem %s1, %s137
      %p139 = scmp.lt.s32.totalorder %s13, 1
      %s140 = scalar_select %p139, %s13, 1
      %s141 = smul.addr %s140, 16
      %s142 = smul.addr %s141, 2
      %s143 = scalar_lea.vmem %s2, %s142
      %v145 = vld [vmem:[%s138] sm:$0xf]
      %v146 = vld [vmem:[%s138 + $0x4] sm:$0xf]
      loop: start=0, step=1, limit=16
      $region29: #{encoder_forward.14} parent=27 // loop_pre_header
        _
      $region30: #{encoder_forward.14} parent=27 // loop_header
        %s148 = sphi 0, %s152
        %p149 = scmp.ge.s32.totalorder %s148, 16
        %v153 = vphi 0.0, %v247
        %v154 = vphi 0.0, %v241
      $region31: #{encoder_forward.14} parent=27 // loop_header_branch
        %151 = sbr.rel (%p149) target = $region35
      $region32: #{encoder_forward.14} parent=27 // loop_body
        %p155 = scmp.eq.s32.totalorder %s13, 0
        %s156 = ssub.s32 15, %s148
        %s157 = scalar_select %p155, %s148, %s156
        %s158 = smul.u32 %s157, 2
        %s159 = scalar_lea.vmem %s0, %s158
        %v160 = vld [vmem:[%s159] sm:$0x3]
        %s161 = scalar_select %p155, 1, 0
        %v162 = vstv %s161
        %vm163 = vcmp.eq.s32.totalorder %v162, 1
        %165 = vrot.lane.b32.xlu0 %v160, 64
        %v166 = vpop.permute.xlu0 %165
        %v168 = vsel %vm163, %v160, %v166
        %v169 = vpack.c.bf16 %v153, %v153
        %171 = vrot.lane.b32.xlu0 %v169, 96
        %v172 = vpop.permute.xlu0 %171
        %v175 = vunpack.c.l.b16 %v145
        %v176 = vunpack.c.l.b16 %v146
        %v177 = vpack.c.b16 %v176, %v175
        %vm179 = vcmask 130048
        %v181 = vsel %vm179, %v172, 0
        %183 = vmatprep.subr.bf16.mxu0 0
        %184 = vmatpush1.bf16.msra.mxu0 %v177
        %185 = vmatprep.subr.bf16.mxu0 0
        %186 = vmatpush1.bf16.msra.mxu0 0
        %187 = vmatprep.subr.bf16.mxu0 0
        %188 = vmatpush1.bf16.msra.mxu0 0
        %189 = vmatprep.subr.bf16.mxu0 0
        %190 = vmatpush1.bf16.msra.mxu0 0
        %191 = vmatprep.subr.bf16.mxu0 0
        %192 = vmatpush1.bf16.msra.mxu0 0
        %193 = vmatprep.subr.bf16.mxu0 0
        %194 = vmatpush1.bf16.msra.mxu0 0
        %195 = vmatprep.subr.bf16.mxu0 0
        %196 = vmatpush1.bf16.msra.mxu0 0
        %197 = vmatprep.subr.bf16.mxu0 0
        %198 = vmatpush1.bf16.msra.mxu0 0
        %199 = vmatprep.subr.bf16.mxu0 0
        %200 = vmatpush1.bf16.msra.mxu0 0
        %201 = vmatprep.subr.bf16.mxu0 0
        %202 = vmatpush1.bf16.msra.mxu0 0
        %203 = vmatprep.subr.bf16.mxu0 0
        %204 = vmatpush1.bf16.msra.mxu0 0
        %205 = vmatprep.subr.bf16.mxu0 0
        %206 = vmatpush1.bf16.msra.mxu0 0
        %207 = vmatprep.subr.bf16.mxu0 0
        %208 = vmatpush1.bf16.msra.mxu0 0
        %209 = vmatprep.subr.bf16.mxu0 0
        %210 = vmatpush1.bf16.msra.mxu0 0
        %211 = vmatprep.subr.bf16.mxu0 0
        %212 = vmatpush1.bf16.msra.mxu0 0
        %213 = vmatprep.subr.bf16.mxu0 0
        %214 = vmatpush1.bf16.msra.mxu0 0
        %215 = vmatprep.mubr.bf16.mxu0 0
        %216 = vmatmul.mubr.bf16.gmra.mrb[0].mxu0 %v181
        %v217 = vpop.f32.mrb[0].mxu0
        %v218 = vadd.f32 0.0, %v217
        %v219 = vpop.f32.mrb[0].mxu0
        %v220 = vpop.f32.mrb[0].mxu0
        %v221 = vpop.f32.mrb[0].mxu0
        %222 = vdwg.mxu0
        %v223 = vadd.f32 %v168, %v218
        %v224 = vxor.u32 %v223, 2147483648
        %v225 = vmul.f32 %v224, 1.442695
        %v226 = vpow.pop %v225
        %v227 = vadd.f32 %v226, 1.0
        %v228 = vrcp.pop %v227
        %v229 = vmul.f32 1.0, %v228
        %v230 = vtanh.pop %v223
        %v231 = vmul.f32 %v229, %v154
        %233 = vrot.lane.b32.xlu0 %v230, 80
        %v234 = vpop.permute.xlu0 %233
        %v236 = vmul.f32 %v229, %v234
        %238 = vrot.lane.b32.xlu0 %v236, 16
        %v239 = vpop.permute.xlu0 %238
        %v241 = vadd.f32 %v231, %v239
        %v242 = vtanh.pop %v241
        %244 = vrot.lane.b32.xlu0 %v242, 16
        %v245 = vpop.permute.xlu0 %244
        %v247 = vmul.f32 %v229, %v245
        %249 = vrot.lane.b32.xlu0 %v247, 96
        %v250 = vpop.permute.xlu0 %249
        %s252 = scalar_lea.vmem %s143, %s158
        %vm253 = vcmask 123904
        %254 = vst.msk [vmem:[%s252] sm:$0x3] %vm253, %v250
      $region33: #{encoder_forward.14} parent=27 // loop_footer
        %s152 = sadd.s32 1, %s148
      $region34: #{encoder_forward.14} parent=27 // loop_footer_branch
        %147 = sbr.rel target = $region30
      $region35: #{encoder_forward.14} parent=27 // loop_exit
        _
      %p255 = scmp.lt.s32.totalorder %s13, 1
      %s256 = scalar_select %p255, %s13, 1
      %s257 = smul.addr %s256, 16
      %s258 = smul.addr %s257, 2
      %s259 = scalar_lea.vmem %s2, %s258
      // Predicated region
      $region36: #{encoder_forward.14} parent=27 // pred_check
        %p260 = pneg %p78
      $region37: #{encoder_forward.14} parent=27 // pred_check_branch
        %262 = sbr.rel (%p260) target = $region39
      $region38: #{encoder_forward.14} parent=27 // pred_region
        _
      $region39: #{encoder_forward.14} parent=27 // pred_fallthru
        _
    $region28: #{encoder_forward.14} parent=5 // pred_fallthru
      _
    %p263 = scmp.le.s32.totalorder 2, %s8
    // Predicated region
    $region40: #{encoder_forward.14} parent=5 // pred_check
      %p264 = pneg %p263
    $region41: #{encoder_forward.14} parent=5 // pred_check_branch
      %266 = sbr.rel (%p264) target = $region43
    $region42: #{encoder_forward.14} parent=5 // pred_region
      %s267 = ssub.s32 %s8, 2
      // Predicated region
      $region44: #{encoder_forward.14} parent=42 // pred_check
        %p268 = pneg %p84
      $region45: #{encoder_forward.14} parent=42 // pred_check_branch
        %270 = sbr.rel (%p268) target = $region47
      $region46: #{encoder_forward.14} parent=42 // pred_region
        %p271 = scmp.lt.s32.totalorder %s14, 1
        %s272 = scalar_select %p271, %s14, 1
        %s273 = smul.addr %s272, 16
        %s274 = smul.addr %s273, 2
        %s275 = scalar_lea.vmem %s2, %s274
      $region47: #{encoder_forward.14} parent=42 // pred_fallthru
        _
    $region43: #{encoder_forward.14} parent=5 // pred_fallthru
      _
  $region6: #{encoder_forward.14} parent=0 // loop_footer
    %s12 = sadd.s32 1, %s8
  $region7: #{encoder_forward.14} parent=0 // loop_footer_branch
    %7 = sbr.rel target = $region3
  $region8: #{encoder_forward.14} parent=0 // loop_exit
    _

// kernel: encoder_forward.17
$region0: #{encoder_forward.17}
  #allocation0 [shape = 'u32[]', space=smem, size = 0x4, offset = 0x4, fixed_abs, tag = 'smem constant byte address 0x4 - core index']
  #allocation1 [shape = 'u32[144,128]{1,0:T(1,128)}', space=vmem, size = 0x12000, scoped, tag = 'internal scratch']
  #allocation2 [shape = 'f32[32,128]{1,0:T(8,128)}', space=vmem, size = 0x4000, scoped, tag = 'scratch operand']
  %s0 = inlined_call_operand.vmem [shape: bf16[32,128], index: 0, kind: input, shape index: {}]
  %s1 = inlined_call_operand.vmem [shape: bf16[128,128], index: 1, kind: input, shape index: {}]
  %s2 = inlined_call_operand.vmem [shape: f32[1,128], index: 2, kind: input, shape index: {}]
  %s3 = inlined_call_operand.hbm [shape: f32[32,128], index: 3, kind: output, shape index: {}]
  %s4 = sld [smem:[#allocation0]]
  $region30: #{encoder_forward.17} parent=0
    _
  %s6 = ssub.s32 1, %s4
  %s7 = scalar_select 0, %s6, %s4
  $region1: #{encoder_forward.17} parent=0
    #allocation3 [shape = 'u8[16384]{0}', space=vmem, size = 0x4000, scoped, tag = 'output window, operand 0, single buffered']
    #allocation4 [shape = 's32[1]{0}', space=sflag, size = 0x4, scoped, tag = 'scoped memory for encoder_forward.17']
    %8 = vsyncpa [#allocation4], 0
    // Predicated region
    $region2: #{encoder_forward.17} parent=1 // pred_check
      _
    $region3: #{encoder_forward.17} parent=1 // pred_check_branch
      %10 = sbr.rel (0) target = $region5
    $region4: #{encoder_forward.17} parent=1 // pred_region
      _
    $region5: #{encoder_forward.17} parent=1 // pred_fallthru
      _
    // Predicated region
    $region6: #{encoder_forward.17} parent=1 // pred_check
      _
    $region7: #{encoder_forward.17} parent=1 // pred_check_branch
      %12 = sbr.rel (0) target = $region9
    $region8: #{encoder_forward.17} parent=1 // pred_region
      _
    $region9: #{encoder_forward.17} parent=1 // pred_fallthru
      _
    // Predicated region
    $region10: #{encoder_forward.17} parent=1 // pred_check
      _
    $region11: #{encoder_forward.17} parent=1 // pred_check_branch
      %14 = sbr.rel (0) target = $region13
    $region12: #{encoder_forward.17} parent=1 // pred_region
      _
    $region13: #{encoder_forward.17} parent=1 // pred_fallthru
      _
    %p16 = scmp.eq.s32.totalorder 0, 0
    // Predicated region
    $region14: #{encoder_forward.17} parent=1 // pred_check
      %p17 = pneg %p16
    $region15: #{encoder_forward.17} parent=1 // pred_check_branch
      %19 = sbr.rel (%p17) target = $region17
    $region16: #{encoder_forward.17} parent=1 // pred_region
      %20 = vst [vmem:[#allocation2] sm:$0xff] 0.0
      %21 = vst [vmem:[#allocation2 + $0x8] sm:$0xff] 0.0
      %22 = vst [vmem:[#allocation2 + $0x10] sm:$0xff] 0.0
      %23 = vst [vmem:[#allocation2 + $0x18] sm:$0xff] 0.0
    $region17: #{encoder_forward.17} parent=1 // pred_fallthru
      _
    %v24 = vld [vmem:[#allocation2] sm:$0xff]
    %v25 = vld [vmem:[#allocation2 + $0x8] sm:$0xff]
    %v26 = vld [vmem:[#allocation2 + $0x10] sm:$0xff]
    %v27 = vld [vmem:[#allocation2 + $0x18] sm:$0xff]
    %v28 = vld [vmem:[%s0] sm:$0xf]
    %v29 = vld [vmem:[%s0 + $0x4] sm:$0xf]
    %v30 = vld [vmem:[%s0 + $0x8] sm:$0xf]
    %v31 = vld [vmem:[%s0 + $0xc] sm:$0xf]
    %v32 = vld [vmem:[%s1] sm:$0xf]
    %v33 = vld [vmem:[%s1 + $0x4] sm:$0xf]
    %v34 = vld [vmem:[%s1 + $0x8] sm:$0xf]
    %v35 = vld [vmem:[%s1 + $0xc] sm:$0xf]
    %v36 = vld [vmem:[%s1 + $0x10] sm:$0xf]
    %v37 = vld [vmem:[%s1 + $0x14] sm:$0xf]
    %v38 = vld [vmem:[%s1 + $0x18] sm:$0xf]
    %v39 = vld [vmem:[%s1 + $0x1c] sm:$0xf]
    %v40 = vld [vmem:[%s1 + $0x20] sm:$0xf]
    %v41 = vld [vmem:[%s1 + $0x24] sm:$0xf]
    %v42 = vld [vmem:[%s1 + $0x28] sm:$0xf]
    %v43 = vld [vmem:[%s1 + $0x2c] sm:$0xf]
    %v44 = vld [vmem:[%s1 + $0x30] sm:$0xf]
    %v45 = vld [vmem:[%s1 + $0x34] sm:$0xf]
    %v46 = vld [vmem:[%s1 + $0x38] sm:$0xf]
    %v47 = vld [vmem:[%s1 + $0x3c] sm:$0xf]
    %v52 = vunpack.c.l.b16 %v28
    %v53 = vunpack.c.l.b16 %v29
    %v54 = vunpack.c.l.b16 %v30
    %v55 = vunpack.c.l.b16 %v31
    %v56 = vpack.c.b16 %v53, %v52
    %v57 = vpack.c.b16 %v55, %v54
    %v76 = vunpack.c.l.b16 %v32
    %v77 = vunpack.c.l.b16 %v33
    %v78 = vunpack.c.l.b16 %v34
    %v79 = vunpack.c.l.b16 %v35
    %v80 = vunpack.c.l.b16 %v36
    %v81 = vunpack.c.l.b16 %v37
    %v82 = vunpack.c.l.b16 %v38
    %v83 = vunpack.c.l.b16 %v39
    %v84 = vunpack.c.l.b16 %v40
    %v85 = vunpack.c.l.b16 %v41
    %v86 = vunpack.c.l.b16 %v42
    %v87 = vunpack.c.l.b16 %v43
    %v88 = vunpack.c.l.b16 %v44
    %v89 = vunpack.c.l.b16 %v45
    %v90 = vunpack.c.l.b16 %v46
    %v91 = vunpack.c.l.b16 %v47
    %v92 = vpack.c.b16 %v77, %v76
    %v93 = vpack.c.b16 %v79, %v78
    %v94 = vpack.c.b16 %v81, %v80
    %v95 = vpack.c.b16 %v83, %v82
    %v96 = vpack.c.b16 %v85, %v84
    %v97 = vpack.c.b16 %v87, %v86
    %v98 = vpack.c.b16 %v89, %v88
    %v99 = vpack.c.b16 %v91, %v90
    %108 = vmatprep.subr.bf16.mxu0 0
    %109 = vmatpush1.bf16.msra.mxu0 %v92
    %110 = vmatprep.subr.bf16.mxu0 0
    %111 = vmatpush1.bf16.msra.mxu0 %v93
    %112 = vmatprep.subr.bf16.mxu0 0
    %113 = vmatpush1.bf16.msra.mxu0 %v94
    %114 = vmatprep.subr.bf16.mxu0 0
    %115 = vmatpush1.bf16.msra.mxu0 %v95
    %116 = vmatprep.subr.bf16.mxu0 0
    %117 = vmatpush1.bf16.msra.mxu0 %v96
    %118 = vmatprep.subr.bf16.mxu0 0
    %119 = vmatpush1.bf16.msra.mxu0 %v97
    %120 = vmatprep.subr.bf16.mxu0 0
    %121 = vmatpush1.bf16.msra.mxu0 %v98
    %122 = vmatprep.subr.bf16.mxu0 0
    %123 = vmatpush1.bf16.msra.mxu0 %v99
    %124 = vmatprep.subr.bf16.mxu0 0
    %125 = vmatpush1.bf16.msra.mxu0 0
    %126 = vmatprep.subr.bf16.mxu0 0
    %127 = vmatpush1.bf16.msra.mxu0 0
    %128 = vmatprep.subr.bf16.mxu0 0
    %129 = vmatpush1.bf16.msra.mxu0 0
    %130 = vmatprep.subr.bf16.mxu0 0
    %131 = vmatpush1.bf16.msra.mxu0 0
    %132 = vmatprep.subr.bf16.mxu0 0
    %133 = vmatpush1.bf16.msra.mxu0 0
    %134 = vmatprep.subr.bf16.mxu0 0
    %135 = vmatpush1.bf16.msra.mxu0 0
    %136 = vmatprep.subr.bf16.mxu0 0
    %137 = vmatpush1.bf16.msra.mxu0 0
    %138 = vmatprep.subr.bf16.mxu0 0
    %139 = vmatpush1.bf16.msra.mxu0 0
    %140 = vmatprep.mubr.bf16.mxu0 0
    %141 = vmatmul.mubr.bf16.gmra.mrb[0].mxu0 %v56
    %v142 = vpop.f32.mrb[0].mxu0
    %v143 = vadd.f32 0.0, %v142
    %v144 = vpop.f32.mrb[0].mxu0
    %v145 = vpop.f32.mrb[0].mxu0
    %v146 = vadd.f32 0.0, %v145
    %v147 = vpop.f32.mrb[0].mxu0
    %148 = vmatprep.mubr.bf16.mxu0 0
    %149 = vmatmul.mubr.bf16.gmra.mrb[0].mxu0 %v57
    %v150 = vpop.f32.mrb[0].mxu0
    %v151 = vadd.f32 0.0, %v150
    %v152 = vpop.f32.mrb[0].mxu0
    %v153 = vpop.f32.mrb[0].mxu0
    %v154 = vadd.f32 0.0, %v153
    %v155 = vpop.f32.mrb[0].mxu0
    %156 = vdwg.mxu0
    %v157 = vadd.f32 %v24, %v143
    %v158 = vadd.f32 %v25, %v146
    %v159 = vadd.f32 %v26, %v151
    %v160 = vadd.f32 %v27, %v154
    %161 = vst [vmem:[#allocation2] sm:$0xff] %v157
    %162 = vst [vmem:[#allocation2 + $0x8] sm:$0xff] %v158
    %163 = vst [vmem:[#allocation2 + $0x10] sm:$0xff] %v159
    %164 = vst [vmem:[#allocation2 + $0x18] sm:$0xff] %v160
    // Predicated region
    $region18: #{encoder_forward.17} parent=1 // pred_check
      %p165 = pneg %p16
    $region19: #{encoder_forward.17} parent=1 // pred_check_branch
      %167 = sbr.rel (%p165) target = $region21
    $region20: #{encoder_forward.17} parent=1 // pred_region
      %v168 = vld [vmem:[#allocation2] sm:$0xff]
      %v169 = vld [vmem:[#allocation2 + $0x8] sm:$0xff]
      %v170 = vld [vmem:[#allocation2 + $0x10] sm:$0xff]
      %v171 = vld [vmem:[#allocation2 + $0x18] sm:$0xff]
      %v172 = vld [vmem:[%s2] sm:$0x1]
      %v174 = vlaneseq
      %v175 = vshrl.u32 %v174, 7
      %v176 = vsub.s32 0, %v175
      %v177 = vrot.slane %v172, %v176
      %v179 = vadd.f32 %v168, %v177
      %v180 = vadd.f32 %v169, %v177
      %v181 = vadd.f32 %v170, %v177
      %v182 = vadd.f32 %v171, %v177
      %183 = vst [vmem:[#allocation3] sm:$0xff] %v179
      %184 = vst [vmem:[#allocation3 + $0x8] sm:$0xff] %v180
      %185 = vst [vmem:[#allocation3 + $0x10] sm:$0xff] %v181
      %186 = vst [vmem:[#allocation3 + $0x18] sm:$0xff] %v182
    $region21: #{encoder_forward.17} parent=1 // pred_fallthru
      _
    // Predicated region
    $region22: #{encoder_forward.17} parent=1 // pred_check
      _
    $region23: #{encoder_forward.17} parent=1 // pred_check_branch
      %188 = sbr.rel (0) target = $region25
    $region24: #{encoder_forward.17} parent=1 // pred_region
      %s190 = ssub.s32 512, 512
      %191 = vsyncadd [#allocation4], %s190
      %s192 = sshll.u32 [#allocation3], 4
      %s193 = int_to_ptr.vmem [resolvable:$true] %s192
      %198 = dma.vmem_to_hbm [thread:$0]  %s193, 512, %s3, [#allocation4], 128, 128, 8
    $region25: #{encoder_forward.17} parent=1 // pred_fallthru
      _
    // Predicated region
    $region26: #{encoder_forward.17} parent=1 // pred_check
      _
    $region27: #{encoder_forward.17} parent=1 // pred_check_branch
      %200 = sbr.rel (0) target = $region29
    $region28: #{encoder_forward.17} parent=1 // pred_region
      %201 = dma.done [#allocation4], 512
    $region29: #{encoder_forward.17} parent=1 // pred_fallthru
      _
    %202 = vsyncpa [#allocation4], 1

</llo_original>
